<compile_context>
chip_gen: v6e
topology: v6e:2x2x1
jax: 0.10.0
libtpu: 0.0.40
codegen_flags: <defaults>
</compile_context>

<pallas_src>
import functools

import jax
import jax.numpy as jnp
from jax.experimental import pallas as pl
from jax.experimental.pallas import tpu as pltpu


_VMEM_LIMIT = 48 * 1024 * 1024  # safe on v5e/v6e (128 MiB) and v7x (64 MiB)


def _round_up(x, m):
    return (x + m - 1) // m * m


# -----------------------------------------------------------------------------
# Pallas kernels
# -----------------------------------------------------------------------------
def _conv_taps_relu_kernel(x_ref, w_ref, b_ref, o_ref, *, offsets, m):
    """Shifted-tap conv + bias + ReLU.

    x_ref: (1, P, K)   bf16, row-flattened zero-padded image
    w_ref: (T, K, Cout) bf16, one (K, Cout) matrix per tap
    b_ref: (1, Cout)    f32
    o_ref: (1, M, Cout) f32, M rows in padded-width coordinates
    offsets: static per-tap row offsets into P (len == T).
    """
    o0 = offsets[0]
    acc = jnp.dot(x_ref[0, o0:o0 + m, :], w_ref[0],
                  preferred_element_type=jnp.float32)
    for t in range(1, len(offsets)):
        o = offsets[t]
        acc = acc + jnp.dot(x_ref[0, o:o + m, :], w_ref[t],
                            preferred_element_type=jnp.float32)
    o_ref[0] = jnp.maximum(acc + b_ref[...], 0.0).astype(o_ref.dtype)


def _avgpool2x2_kernel(x_ref, o_ref, *, c):
    """x_ref: (1, Ho, 2, Wo, 2*C)  o_ref: (1, Ho, Wo, C)."""
    s = (x_ref[0, :, 0, :, 0:c] + x_ref[0, :, 0, :, c:2 * c]
         + x_ref[0, :, 1, :, 0:c] + x_ref[0, :, 1, :, c:2 * c])
    o_ref[0] = s * 0.25


def _maxpool2x2_kernel(x_ref, o_ref, *, c):
    o_ref[0] = jnp.maximum(
        jnp.maximum(x_ref[0, :, 0, :, 0:c], x_ref[0, :, 0, :, c:2 * c]),
        jnp.maximum(x_ref[0, :, 1, :, 0:c], x_ref[0, :, 1, :, c:2 * c]),
    )


# -----------------------------------------------------------------------------
# Wrappers (thin XLA glue: pad / reshape; no tap duplication in HBM)
# -----------------------------------------------------------------------------
def conv3x3_relu(x, w, b):
    """x: (N,H,W,Cin) f32, w: (3,3,Cin,Cout) HWIO, b: (Cout,) -> (N,H,W,Cout) f32."""
    n, h, wd, cin = x.shape
    cout = w.shape[-1]
    wp = wd + 2                       # padded width
    m = h * wp                        # output rows in padded-width coords
    p = (h + 2) * wp                  # flattened padded image rows
    p_pad = _round_up(p + 2, 8)       # +2 so the garbage columns stay in-bounds

    xp = jnp.pad(x, ((0, 0), (1, 1), (1, 1), (0, 0))).reshape(n, p, cin)
    xf = jnp.pad(xp, ((0, 0), (0, p_pad - p), (0, 0))).astype(jnp.bfloat16)
    offsets = tuple(dy * wp + dx for dy in range(3) for dx in range(3))

    if 9 * cin <= 128:
        # conv1_1: fold the 9 taps into a single K = 9*Cin contraction.
        x_in = jnp.concatenate([xf[:, o:o + m, :] for o in offsets], axis=-1)
        w_in = w.reshape(9 * cin, cout)[None].astype(jnp.bfloat16)   # (1, 9*Cin, Cout)
        offs = (0,)
    else:
        x_in = xf                                                    # (N, P_pad, Cin)
        w_in = w.reshape(9, cin, cout).astype(jnp.bfloat16)          # (9, Cin, Cout)
        offs = offsets
    b_in = b.reshape(1, cout).astype(jnp.float32)

    kernel = functools.partial(_conv_taps_relu_kernel, offsets=offs, m=m)
    out = pl.pallas_call(
        kernel,
        out_shape=jax.ShapeDtypeStruct((n, m, cout), jnp.float32),
        grid=(n,),
        in_specs=[
            pl.BlockSpec((1,) + x_in.shape[1:], lambda i: (i, 0, 0)),
            pl.BlockSpec(w_in.shape, lambda i: (0, 0, 0)),   # resident weights
            pl.BlockSpec((1, cout), lambda i: (0, 0)),       # resident bias
        ],
        out_specs=pl.BlockSpec((1, m, cout), lambda i: (i, 0, 0)),
        compiler_params=pltpu.CompilerParams(
            dimension_semantics=("parallel",),
            vmem_limit_bytes=_VMEM_LIMIT,
        ),
    )(x_in, w_in, b_in)
    # Drop the two garbage columns per row (padded-width -> valid width).
    return out.reshape(n, h, wp, cout)[:, :, :wd, :]


def pool2x2(x, pool="avg"):
    """x: (N,H,W,C) -> (N,H//2,W//2,C), 2x2 window, stride 2."""
    n, h, wd, c = x.shape
    ho, wo = h // 2, wd // 2
    xr = x.reshape(n, ho, 2, wo, 2 * c)   # free view; no quad duplication
    kern = _avgpool2x2_kernel if pool == "avg" else _maxpool2x2_kernel
    out = pl.pallas_call(
        functools.partial(kern, c=c),
        out_shape=jax.ShapeDtypeStruct((n, ho, wo, c), jnp.float32),
        grid=(n,),
        in_specs=[pl.BlockSpec((1, ho, 2, wo, 2 * c), lambda i: (i, 0, 0, 0, 0))],
        out_specs=pl.BlockSpec((1, ho, wo, c), lambda i: (i, 0, 0, 0)),
        compiler_params=pltpu.CompilerParams(
            dimension_semantics=("parallel",),
            vmem_limit_bytes=_VMEM_LIMIT,
        ),
    )(xr)
    return out


# -----------------------------------------------------------------------------
# VGG structure + deterministic parameter init
# -----------------------------------------------------------------------------
BLOCKS = [
    ["conv1_1", "conv1_2"],
    ["conv2_1", "conv2_2"],
    ["conv3_1", "conv3_2", "conv3_3", "conv3_4"],
    ["conv4_1", "conv4_2", "conv4_3", "conv4_4"],
    ["conv5_1", "conv5_2", "conv5_3", "conv5_4"],
]
BLOCK_OUT_CHANNELS = [64, 128, 256, 512, 512]


def init_params(key):
    params = {}
    cin = 3
    for bi, names in enumerate(BLOCKS):
        cout = BLOCK_OUT_CHANNELS[bi]
        for name in names:
            key, kw, kb = jax.random.split(key, 3)
            fan_in = cin * 9
            w = jax.random.normal(kw, (3, 3, cin, cout), jnp.float32) * jnp.sqrt(
                2.0 / fan_in
            )
            b = jax.random.normal(kb, (cout,), jnp.float32) * 0.01
            params[name] = (w, b)
            cin = cout
    return params


def vgg_forward(x_nchw, params, out_keys, pool="avg"):
    """Matches VGG.forward(x, out_keys): returns [out[k] for k in out_keys], NCHW."""
    h = jnp.transpose(x_nchw, (0, 2, 3, 1))  # NCHW -> NHWC
    out = {}
    for bi, names in enumerate(BLOCKS, start=1):
        for ci, name in enumerate(names, start=1):
            w, b = params[name]
            h = conv3x3_relu(h, w, b)
            out[f"r{bi}{ci}"] = h
        h = pool2x2(h, pool)
        out[f"p{bi}"] = h
    return [jnp.transpose(out[k], (0, 3, 1, 2)) for k in out_keys]  # back to NCHW


# -----------------------------------------------------------------------------
# Pure-JAX reference with matching bf16 MXU quantization (for correctness)
# -----------------------------------------------------------------------------
def vgg_forward_ref(x_nchw, params, out_keys, pool="avg"):
    h = x_nchw
    out = {}
    for bi, names in enumerate(BLOCKS, start=1):
        for ci, name in enumerate(names, start=1):
            w, b = params[name]
            y = jax.lax.conv_general_dilated(
                h.astype(jnp.bfloat16), w.astype(jnp.bfloat16),
                (1, 1), [(1, 1), (1, 1)],
                dimension_numbers=("NCHW", "HWIO", "NCHW"),
                preferred_element_type=jnp.float32,
            )
            h = jax.nn.relu(y + b[None, :, None, None])
            out[f"r{bi}{ci}"] = h
        if pool == "avg":
            h = jax.lax.reduce_window(
                h, 0.0, jax.lax.add, (1, 1, 2, 2), (1, 1, 2, 2), "VALID"
            ) * 0.25
        else:
            h = jax.lax.reduce_window(
                h, -jnp.inf, jax.lax.max, (1, 1, 2, 2), (1, 1, 2, 2), "VALID"
            )
        out[f"p{bi}"] = h
    return [out[k] for k in out_keys]


# -----------------------------------------------------------------------------
if __name__ == "__main__":
    key = jax.random.PRNGKey(0)
    kx, kp = jax.random.split(key)
    # 32x32 spatial so that 5 successive 2x2 pools stay valid
    # (32 -> 16 -> 8 -> 4 -> 2 -> 1); channel widths fixed by the module.
    x = jax.random.normal(kx, (2, 3, 32, 32), jnp.float32)
    params = init_params(kp)

    out_keys = ["r11", "r22", "r34", "p3", "r44", "r54", "p5"]
    outs = vgg_forward(x, params, out_keys, pool="avg")
    outs = [jax.block_until_ready(o) for o in outs]

    refs = vgg_forward_ref(x, params, out_keys, pool="avg")
    for k, o, r in zip(out_keys, outs, refs):
        assert o.shape == r.shape, (k, o.shape, r.shape)
        err = float(jnp.max(jnp.abs(o - r)))
        scale = 1.0 + float(jnp.max(jnp.abs(r)))
        # Both paths use identical bf16 operands + f32 accumulation; only the
        # accumulation order differs, so a small relative tolerance suffices.
        assert err <= 2e-2 * scale, (k, err, scale)

    print("KERNEL_OK")
</pallas_src>

<mosaic_0001>
module attributes {stable_mosaic.version = 11 : i64} {
  func.func @_conv_taps_relu_kernel(%arg0: i32, %arg1: memref<1x1088x27xbf16, #tpu.memory_space<vmem>>, %arg2: memref<1x27x64xbf16, #tpu.memory_space<vmem>>, %arg3: memref<1x64xf32, #tpu.memory_space<vmem>>, %arg4: memref<1x1088x64xf32, #tpu.memory_space<vmem>>) attributes {dimension_semantics = [#tpu.dimension_semantics<parallel>], iteration_bounds = array<i64: 2>, scalar_prefetch = 0 : i64, scratch_operands = 0 : i64, tpu.core_type = #tpu.core_type<tc>, window_params = [{transform_indices = @transform_0, window_bounds = array<i64: 1, 1088, 27>}, {pipeline_mode = #tpu.pipeline_mode<synchronous>, transform_indices = @transform_1, window_bounds = array<i64: 1, 27, 64>}, {pipeline_mode = #tpu.pipeline_mode<synchronous>, transform_indices = @transform_2, window_bounds = array<i64: 1, 64>}, {transform_indices = @transform_3, window_bounds = array<i64: 1, 1088, 64>}]} {
    %c0 = arith.constant 0 : index
    %c0_0 = arith.constant 0 : index
    %c0_1 = arith.constant 0 : index
    %0 = vector.load %arg1[%c0, %c0_0, %c0_1] : memref<1x1088x27xbf16, #tpu.memory_space<vmem>>, vector<1x1088x27xbf16>
    %1 = vector.shape_cast %0 : vector<1x1088x27xbf16> to vector<1088x27xbf16>
    %c0_2 = arith.constant 0 : index
    %c0_3 = arith.constant 0 : index
    %c0_4 = arith.constant 0 : index
    %2 = vector.load %arg2[%c0_2, %c0_3, %c0_4] : memref<1x27x64xbf16, #tpu.memory_space<vmem>>, vector<1x27x64xbf16>
    %3 = vector.shape_cast %2 : vector<1x27x64xbf16> to vector<27x64xbf16>
    %cst = arith.constant dense<0.000000e+00> : vector<1088x64xf32>
    %4 = tpu.matmul %1, %3, %cst {dimension_numbers = #tpu.dot_dimension_numbers<[1], [0], [0], [1], [0, 0, 1, 1], [], []>} : vector<1088x27xbf16>, vector<27x64xbf16>, vector<1088x64xf32> -> vector<1088x64xf32>
    %c0_5 = arith.constant 0 : index
    %c0_6 = arith.constant 0 : index
    %5 = vector.load %arg3[%c0_5, %c0_6] : memref<1x64xf32, #tpu.memory_space<vmem>>, vector<1x64xf32>
    %6 = vector.broadcast %5 : vector<1x64xf32> to vector<1088x64xf32>
    %7 = arith.addf %4, %6 : vector<1088x64xf32>
    %cst_7 = arith.constant 0.000000e+00 : f32
    %8 = vector.broadcast %cst_7 : f32 to vector<1088x64xf32>
    %9 = arith.maximumf %7, %8 : vector<1088x64xf32>
    %c0_8 = arith.constant 0 : index
    %c0_9 = arith.constant 0 : index
    %c0_10 = arith.constant 0 : index
    %10 = vector.load %arg4[%c0_8, %c0_9, %c0_10] : memref<1x1088x64xf32, #tpu.memory_space<vmem>>, vector<1x1088x64xf32>
    %11 = vector.shape_cast %10 : vector<1x1088x64xf32> to vector<1088x64xf32>
    %12 = vector.shape_cast %9 : vector<1088x64xf32> to vector<1x1088x64xf32>
    tpu.vector_store %arg4[%c0_8, %c0_9, %c0_10], %12 {strides = array<i32>} : memref<1x1088x64xf32, #tpu.memory_space<vmem>>, vector<1x1088x64xf32>,
    return
  }
  func.func @transform_0(%arg0: i32) -> (i32, i32, i32) {
    %c0_i32 = arith.constant 0 : i32
    %c0_i32_0 = arith.constant 0 : i32
    %c0_i32_1 = arith.constant 0 : i32
    return %arg0, %c0_i32, %c0_i32_0 : i32, i32, i32
  }
  func.func @transform_1(%arg0: i32) -> (i32, i32, i32) {
    %c0_i32 = arith.constant 0 : i32
    %c0_i32_0 = arith.constant 0 : i32
    %c0_i32_1 = arith.constant 0 : i32
    %c0_i32_2 = arith.constant 0 : i32
    return %c0_i32, %c0_i32_0, %c0_i32_1 : i32, i32, i32
  }
  func.func @transform_2(%arg0: i32) -> (i32, i32) {
    %c0_i32 = arith.constant 0 : i32
    %c0_i32_0 = arith.constant 0 : i32
    %c0_i32_1 = arith.constant 0 : i32
    return %c0_i32, %c0_i32_0 : i32, i32
  }
  func.func @transform_3(%arg0: i32) -> (i32, i32, i32) {
    %c0_i32 = arith.constant 0 : i32
    %c0_i32_0 = arith.constant 0 : i32
    %c0_i32_1 = arith.constant 0 : i32
    return %arg0, %c0_i32, %c0_i32_0 : i32, i32, i32
  }
}

</mosaic_0001>

<llo_original>
// kernel: tpu_custom_call.1
$region0: #{tpu_custom_call.1}
  #allocation0 [shape = 'u32[]', space=smem, size = 0x4, offset = 0x4, fixed_abs, tag = 'smem constant byte address 0x4 - core index']
  #allocation1 [shape = 'u32[144,128]{1,0:T(1,128)}', space=vmem, size = 0x12000, scoped, tag = 'internal scratch']
  %s0 = inlined_call_operand.vmem [shape: bf16[2,1088,27], index: 0, kind: input, shape index: {}]
  %s1 = inlined_call_operand.hbm [shape: bf16[1,27,64], index: 1, kind: input, shape index: {}]
  %s2 = inlined_call_operand.hbm [shape: f32[1,64], index: 2, kind: input, shape index: {}]
  %s3 = inlined_call_operand.vmem [shape: f32[2,1088,64], index: 3, kind: output, shape index: {}]
  %s4 = sld [smem:[#allocation0]]
  $region53: #{tpu_custom_call.1} parent=0
    _
  %s6 = ssub.s32 1, %s4
  %s7 = scalar_select 0, %s6, %s4
  $region1: #{tpu_custom_call.1} parent=0
    #allocation2 [shape = 'u8[8192]{0}', space=vmem, size = 0x2000, scoped, tag = 'input window, operand 1, single buffered']
    #allocation3 [shape = 's32[2]{0}', space=sflag, size = 0x8, scoped, tag = 'scoped memory for tpu_custom_call.1']
    #allocation4 [shape = 'u8[512]{0}', space=vmem, size = 0x400, scoped, tag = 'input window, operand 2, single buffered']
    #allocation5 [shape = 's32[1]{0}', space=sflag, size = 0x4, scoped, tag = 'scoped memory for tpu_custom_call.1']
    %8 = vsyncpa [#allocation3], 0
    %9 = vsyncpa [#allocation5], 0
    loop: start=0, step=1, limit=4
    $region2: #{tpu_custom_call.1} parent=1 // loop_pre_header
      _
    $region3: #{tpu_custom_call.1} parent=1 // loop_header
      %s11 = sphi 0, %s15
      %p12 = scmp.ge.s32.totalorder %s11, 4
      %s21 = sphi 0, %s23
      %s24 = sphi 0, %s21
      %s25 = sphi 0, %s24
      %s41 = sphi 0, %s25
      %s45 = sphi 0, %s45
      %s47 = sphi 0, %s45
      %s48 = sphi 0, %s47
      %s62 = sphi 0, %s48
      %s66 = sphi 0, %s66
      %s68 = sphi 0, %s66
      %s69 = sphi 0, %s68
      %s83 = sphi 0, %s69
      %s89 = sphi 0, %s91
      %s92 = sphi 0, %s89
      %s93 = sphi 0, %s92
      %s109 = sphi 0, %s93
    $region4: #{tpu_custom_call.1} parent=1 // loop_header_branch
      %14 = sbr.rel (%p12) target = $region8
    $region5: #{tpu_custom_call.1} parent=1 // loop_body
      %s16 = ssub.s32 %s11, 1
      %s17 = ssub.s32 %s11, 2
      %s18 = sadd.s32 %s11, 1
      %s19 = ssub.s32 %s11, %s18
      %p20 = scmp.eq.s32.totalorder %s19, 0
      %s22 = sadd.s32 %s21, 1
      %s23 = scalar_select %p20, %s21, %s22
      %p26 = pneg %p20
      %p27 = scmp.eq.s32.totalorder %s11, 1
      %p28 = por %p26, %p27
      %p29 = scmp.ne.s32.totalorder %s21, %s24
      %p30 = scmp.eq.s32.totalorder %s11, 0
      %p31 = por %p29, %p30
      %p32 = scmp.ne.s32.totalorder %s21, %s24
      %p33 = scmp.eq.s32.totalorder %s16, 1
      %p34 = por %p32, %p33
      %p35 = scmp.ne.s32.totalorder %s24, %s25
      %p36 = scmp.eq.s32.totalorder %s16, 0
      %p37 = por %p35, %p36
      %p38 = scmp.ne.s32.totalorder %s24, %s25
      %p39 = scmp.eq.s32.totalorder %s17, 1
      %p40 = por %p38, %p39
      %p42 = scmp.ne.s32.totalorder %s25, %s41
      %p43 = scmp.eq.s32.totalorder %s17, 0
      %p44 = por %p42, %p43
      %s46 = sadd.s32 %s45, 1
      %p49 = scmp.eq.s32.totalorder %s11, 1
      %p50 = scmp.ne.s32.totalorder %s45, %s47
      %p51 = scmp.eq.s32.totalorder %s11, 0
      %p52 = por %p50, %p51
      %p53 = scmp.ne.s32.totalorder %s45, %s47
      %p54 = scmp.eq.s32.totalorder %s16, 1
      %p55 = por %p53, %p54
      %p56 = scmp.ne.s32.totalorder %s47, %s48
      %p57 = scmp.eq.s32.totalorder %s16, 0
      %p58 = por %p56, %p57
      %p59 = scmp.ne.s32.totalorder %s47, %s48
      %p60 = scmp.eq.s32.totalorder %s17, 1
      %p61 = por %p59, %p60
      %p63 = scmp.ne.s32.totalorder %s48, %s62
      %p64 = scmp.eq.s32.totalorder %s17, 0
      %p65 = por %p63, %p64
      %s67 = sadd.s32 %s66, 1
      %p70 = scmp.eq.s32.totalorder %s11, 1
      %p71 = scmp.ne.s32.totalorder %s66, %s68
      %p72 = scmp.eq.s32.totalorder %s11, 0
      %p73 = por %p71, %p72
      %p74 = scmp.ne.s32.totalorder %s66, %s68
      %p75 = scmp.eq.s32.totalorder %s16, 1
      %p76 = por %p74, %p75
      %p77 = scmp.ne.s32.totalorder %s68, %s69
      %p78 = scmp.eq.s32.totalorder %s16, 0
      %p79 = por %p77, %p78
      %p80 = scmp.ne.s32.totalorder %s68, %s69
      %p81 = scmp.eq.s32.totalorder %s17, 1
      %p82 = por %p80, %p81
      %p84 = scmp.ne.s32.totalorder %s69, %s83
      %p85 = scmp.eq.s32.totalorder %s17, 0
      %p86 = por %p84, %p85
      %s87 = ssub.s32 %s11, %s18
      %p88 = scmp.eq.s32.totalorder %s87, 0
      %s90 = sadd.s32 %s89, 1
      %s91 = scalar_select %p88, %s89, %s90
      %p94 = pneg %p88
      %p95 = scmp.eq.s32.totalorder %s11, 1
      %p96 = por %p94, %p95
      %p97 = scmp.ne.s32.totalorder %s89, %s92
      %p98 = scmp.eq.s32.totalorder %s11, 0
      %p99 = por %p97, %p98
      %p100 = scmp.ne.s32.totalorder %s89, %s92
      %p101 = scmp.eq.s32.totalorder %s16, 1
      %p102 = por %p100, %p101
      %p103 = scmp.ne.s32.totalorder %s92, %s93
      %p104 = scmp.eq.s32.totalorder %s16, 0
      %p105 = por %p103, %p104
      %p106 = scmp.ne.s32.totalorder %s92, %s93
      %p107 = scmp.eq.s32.totalorder %s17, 1
      %p108 = por %p106, %p107
      %p110 = scmp.ne.s32.totalorder %s93, %s109
      %p111 = scmp.eq.s32.totalorder %s17, 0
      %p112 = por %p110, %p111
      %p113 = scmp.le.s32.totalorder 1, %s11
      %p114 = scmp.lt.s32.totalorder %s11, 3
      %p115 = pnand %p113, %p114
      %p116 = pneg %p115
      // Predicated region
      $region9: #{tpu_custom_call.1} parent=5 // pred_check
        _
      $region10: #{tpu_custom_call.1} parent=5 // pred_check_branch
        %118 = sbr.rel (%p115) target = $region12
      $region11: #{tpu_custom_call.1} parent=5 // pred_region
        %s119 = ssub.s32 %s11, 1
        // Predicated region
        $region13: #{tpu_custom_call.1} parent=11 // pred_check
          %p120 = pneg %p58
        $region14: #{tpu_custom_call.1} parent=11 // pred_check_branch
          %122 = sbr.rel (%p120) target = $region16
        $region15: #{tpu_custom_call.1} parent=11 // pred_region
          %s124 = ssub.s32 256, 256
          %125 = vsyncadd [#allocation3], %s124
          %s126 = sshll.u32 [#allocation2], 4
          %s127 = int_to_ptr.vmem [resolvable:$true] %s126
          %132 = dma.hbm_to_vmem [thread:$0]  %s1, 256, %s127, [#allocation3], 64, 64, 4
        $region16: #{tpu_custom_call.1} parent=11 // pred_fallthru
          _
        // Predicated region
        $region17: #{tpu_custom_call.1} parent=11 // pred_check
          %p133 = pneg %p79
        $region18: #{tpu_custom_call.1} parent=11 // pred_check_branch
          %135 = sbr.rel (%p133) target = $region20
        $region19: #{tpu_custom_call.1} parent=11 // pred_region
          %s137 = ssub.s32 16, 16
          %138 = vsyncadd [#allocation5], %s137
          %s140 = sshll.u32 [#allocation4], 4
          %s141 = int_to_ptr.vmem [resolvable:$true] %s140
          %143 = dma.hbm_to_vmem [thread:$0]  %s2, 16, %s141, [#allocation5]
        $region20: #{tpu_custom_call.1} parent=11 // pred_fallthru
          _
      $region12: #{tpu_custom_call.1} parent=5 // pred_fallthru
        _
      %p144 = scmp.lt.s32.totalorder %s11, 2
      // Predicated region
      $region21: #{tpu_custom_call.1} parent=5 // pred_check
        %p145 = pneg %p144
      $region22: #{tpu_custom_call.1} parent=5 // pred_check_branch
        %147 = sbr.rel (%p145) target = $region24
      $region23: #{tpu_custom_call.1} parent=5 // pred_region
        // Predicated region
        $region25: #{tpu_custom_call.1} parent=23 // pred_check
          %p148 = pneg %p31
        $region26: #{tpu_custom_call.1} parent=23 // pred_check_branch
          %150 = sbr.rel (%p148) target = $region28
        $region27: #{tpu_custom_call.1} parent=23 // pred_region
          %p151 = scmp.lt.s32.totalorder %s11, 1
          %s152 = scalar_select %p151, %s11, 1
          %s153 = smul.addr %s152, 136
          %s154 = smul.addr %s153, 4
          %s155 = scalar_lea.vmem %s0, %s154
        $region28: #{tpu_custom_call.1} parent=23 // pred_fallthru
          _
      $region24: #{tpu_custom_call.1} parent=5 // pred_fallthru
        _
      %p156 = scmp.le.s32.totalorder 1, %s11
      %p157 = scmp.lt.s32.totalorder %s11, 3
      %p158 = pnand %p156, %p157
      %p159 = pneg %p158
      // Predicated region
      $region29: #{tpu_custom_call.1} parent=5 // pred_check
        _
      $region30: #{tpu_custom_call.1} parent=5 // pred_check_branch
        %161 = sbr.rel (%p158) target = $region32
      $region31: #{tpu_custom_call.1} parent=5 // pred_region
        %s162 = ssub.s32 %s11, 1
        // Predicated region
        $region33: #{tpu_custom_call.1} parent=31 // pred_check
          %p163 = pneg %p58
        $region34: #{tpu_custom_call.1} parent=31 // pred_check_branch
          %165 = sbr.rel (%p163) target = $region36
        $region35: #{tpu_custom_call.1} parent=31 // pred_region
          %166 = dma.done [#allocation3], 256
        $region36: #{tpu_custom_call.1} parent=31 // pred_fallthru
          _
        // Predicated region
        $region37: #{tpu_custom_call.1} parent=31 // pred_check
          %p167 = pneg %p79
        $region38: #{tpu_custom_call.1} parent=31 // pred_check_branch
          %169 = sbr.rel (%p167) target = $region40
        $region39: #{tpu_custom_call.1} parent=31 // pred_region
          %170 = dma.done [#allocation5], 16
        $region40: #{tpu_custom_call.1} parent=31 // pred_fallthru
          _
        %p171 = scmp.lt.s32.totalorder %s16, 1
        %s172 = scalar_select %p171, %s16, 1
        %s173 = smul.addr %s172, 136
        %s174 = smul.addr %s173, 4
        %s175 = scalar_lea.vmem %s0, %s174
        %p176 = pneg %p37
        %p177 = pneg %p34
        %p178 = pneg %p58
        %p179 = pneg %p55
        %p180 = pneg %p79
        %p181 = pneg %p76
        %p182 = pneg %p105
        %p183 = pneg %p102
        %p184 = scmp.lt.s32.totalorder %s16, 1
        %s185 = scalar_select %p184, %s16, 1
        %s186 = smul.addr %s185, 136
        %s187 = smul.addr %s186, 8
        %s188 = scalar_lea.vmem %s3, %s187
        %p189 = scmp.lt.s32.totalorder %s16, 1
        %s190 = scalar_select %p189, %s16, 1
        %s191 = smul.addr %s190, 136
        %s192 = smul.addr %s191, 4
        %s193 = scalar_lea.vmem %s0, %s192
        %p194 = scmp.lt.s32.totalorder %s16, 1
        %s195 = scalar_select %p194, %s16, 1
        %s196 = smul.addr %s195, 136
        %s197 = smul.addr %s196, 8
        %s198 = scalar_lea.vmem %s3, %s197
        %v200 = vld [vmem:[%s193] sm:$0xf]
        %v201 = vld [vmem:[%s193 + $0x4] sm:$0xf]
        %v202 = vld [vmem:[%s193 + $0x8] sm:$0xf]
        %v203 = vld [vmem:[%s193 + $0xc] sm:$0xf]
        %v204 = vld [vmem:[%s193 + $0x10] sm:$0xf]
        %v205 = vld [vmem:[%s193 + $0x14] sm:$0xf]
        %v206 = vld [vmem:[%s193 + $0x18] sm:$0xf]
        %v207 = vld [vmem:[%s193 + $0x1c] sm:$0xf]
        %v208 = vld [vmem:[%s193 + $0x20] sm:$0xf]
        %v209 = vld [vmem:[%s193 + $0x24] sm:$0xf]
        %v210 = vld [vmem:[%s193 + $0x28] sm:$0xf]
        %v211 = vld [vmem:[%s193 + $0x2c] sm:$0xf]
        %v212 = vld [vmem:[%s193 + $0x30] sm:$0xf]
        %v213 = vld [vmem:[%s193 + $0x34] sm:$0xf]
        %v214 = vld [vmem:[%s193 + $0x38] sm:$0xf]
        %v215 = vld [vmem:[%s193 + $0x3c] sm:$0xf]
        %v216 = vld [vmem:[%s193 + $0x40] sm:$0xf]
        %v217 = vld [vmem:[%s193 + $0x44] sm:$0xf]
        %v218 = vld [vmem:[%s193 + $0x48] sm:$0xf]
        %v219 = vld [vmem:[%s193 + $0x4c] sm:$0xf]
        %v220 = vld [vmem:[%s193 + $0x50] sm:$0xf]
        %v221 = vld [vmem:[%s193 + $0x54] sm:$0xf]
        %v222 = vld [vmem:[%s193 + $0x58] sm:$0xf]
        %v223 = vld [vmem:[%s193 + $0x5c] sm:$0xf]
        %v224 = vld [vmem:[%s193 + $0x60] sm:$0xf]
        %v225 = vld [vmem:[%s193 + $0x64] sm:$0xf]
        %v226 = vld [vmem:[%s193 + $0x68] sm:$0xf]
        %v227 = vld [vmem:[%s193 + $0x6c] sm:$0xf]
        %v228 = vld [vmem:[%s193 + $0x70] sm:$0xf]
        %v229 = vld [vmem:[%s193 + $0x74] sm:$0xf]
        %v230 = vld [vmem:[%s193 + $0x78] sm:$0xf]
        %v231 = vld [vmem:[%s193 + $0x7c] sm:$0xf]
        %v232 = vld [vmem:[%s193 + $0x80] sm:$0xf]
        %v233 = vld [vmem:[%s193 + $0x84] sm:$0xf]
        %v234 = vld [vmem:[%s193 + $0x88] sm:$0xf]
        %v235 = vld [vmem:[%s193 + $0x8c] sm:$0xf]
        %v236 = vld [vmem:[%s193 + $0x90] sm:$0xf]
        %v237 = vld [vmem:[%s193 + $0x94] sm:$0xf]
        %v238 = vld [vmem:[%s193 + $0x98] sm:$0xf]
        %v239 = vld [vmem:[%s193 + $0x9c] sm:$0xf]
        %v240 = vld [vmem:[%s193 + $0xa0] sm:$0xf]
        %v241 = vld [vmem:[%s193 + $0xa4] sm:$0xf]
        %v242 = vld [vmem:[%s193 + $0xa8] sm:$0xf]
        %v243 = vld [vmem:[%s193 + $0xac] sm:$0xf]
        %v244 = vld [vmem:[%s193 + $0xb0] sm:$0xf]
        %v245 = vld [vmem:[%s193 + $0xb4] sm:$0xf]
        %v246 = vld [vmem:[%s193 + $0xb8] sm:$0xf]
        %v247 = vld [vmem:[%s193 + $0xbc] sm:$0xf]
        %v248 = vld [vmem:[%s193 + $0xc0] sm:$0xf]
        %v249 = vld [vmem:[%s193 + $0xc4] sm:$0xf]
        %v250 = vld [vmem:[%s193 + $0xc8] sm:$0xf]
        %v251 = vld [vmem:[%s193 + $0xcc] sm:$0xf]
        %v252 = vld [vmem:[%s193 + $0xd0] sm:$0xf]
        %v253 = vld [vmem:[%s193 + $0xd4] sm:$0xf]
        %v254 = vld [vmem:[%s193 + $0xd8] sm:$0xf]
        %v255 = vld [vmem:[%s193 + $0xdc] sm:$0xf]
        %v256 = vld [vmem:[%s193 + $0xe0] sm:$0xf]
        %v257 = vld [vmem:[%s193 + $0xe4] sm:$0xf]
        %v258 = vld [vmem:[%s193 + $0xe8] sm:$0xf]
        %v259 = vld [vmem:[%s193 + $0xec] sm:$0xf]
        %v260 = vld [vmem:[%s193 + $0xf0] sm:$0xf]
        %v261 = vld [vmem:[%s193 + $0xf4] sm:$0xf]
        %v262 = vld [vmem:[%s193 + $0xf8] sm:$0xf]
        %v263 = vld [vmem:[%s193 + $0xfc] sm:$0xf]
        %v264 = vld [vmem:[%s193 + $0x100] sm:$0xf]
        %v265 = vld [vmem:[%s193 + $0x104] sm:$0xf]
        %v266 = vld [vmem:[%s193 + $0x108] sm:$0xf]
        %v267 = vld [vmem:[%s193 + $0x10c] sm:$0xf]
        %v268 = vld [vmem:[%s193 + $0x110] sm:$0xf]
        %v269 = vld [vmem:[%s193 + $0x114] sm:$0xf]
        %v270 = vld [vmem:[%s193 + $0x118] sm:$0xf]
        %v271 = vld [vmem:[%s193 + $0x11c] sm:$0xf]
        %v272 = vld [vmem:[%s193 + $0x120] sm:$0xf]
        %v273 = vld [vmem:[%s193 + $0x124] sm:$0xf]
        %v274 = vld [vmem:[%s193 + $0x128] sm:$0xf]
        %v275 = vld [vmem:[%s193 + $0x12c] sm:$0xf]
        %v276 = vld [vmem:[%s193 + $0x130] sm:$0xf]
        %v277 = vld [vmem:[%s193 + $0x134] sm:$0xf]
        %v278 = vld [vmem:[%s193 + $0x138] sm:$0xf]
        %v279 = vld [vmem:[%s193 + $0x13c] sm:$0xf]
        %v280 = vld [vmem:[%s193 + $0x140] sm:$0xf]
        %v281 = vld [vmem:[%s193 + $0x144] sm:$0xf]
        %v282 = vld [vmem:[%s193 + $0x148] sm:$0xf]
        %v283 = vld [vmem:[%s193 + $0x14c] sm:$0xf]
        %v284 = vld [vmem:[%s193 + $0x150] sm:$0xf]
        %v285 = vld [vmem:[%s193 + $0x154] sm:$0xf]
        %v286 = vld [vmem:[%s193 + $0x158] sm:$0xf]
        %v287 = vld [vmem:[%s193 + $0x15c] sm:$0xf]
        %v288 = vld [vmem:[%s193 + $0x160] sm:$0xf]
        %v289 = vld [vmem:[%s193 + $0x164] sm:$0xf]
        %v290 = vld [vmem:[%s193 + $0x168] sm:$0xf]
        %v291 = vld [vmem:[%s193 + $0x16c] sm:$0xf]
        %v292 = vld [vmem:[%s193 + $0x170] sm:$0xf]
        %v293 = vld [vmem:[%s193 + $0x174] sm:$0xf]
        %v294 = vld [vmem:[%s193 + $0x178] sm:$0xf]
        %v295 = vld [vmem:[%s193 + $0x17c] sm:$0xf]
        %v296 = vld [vmem:[%s193 + $0x180] sm:$0xf]
        %v297 = vld [vmem:[%s193 + $0x184] sm:$0xf]
        %v298 = vld [vmem:[%s193 + $0x188] sm:$0xf]
        %v299 = vld [vmem:[%s193 + $0x18c] sm:$0xf]
        %v300 = vld [vmem:[%s193 + $0x190] sm:$0xf]
        %v301 = vld [vmem:[%s193 + $0x194] sm:$0xf]
        %v302 = vld [vmem:[%s193 + $0x198] sm:$0xf]
        %v303 = vld [vmem:[%s193 + $0x19c] sm:$0xf]
        %v304 = vld [vmem:[%s193 + $0x1a0] sm:$0xf]
        %v305 = vld [vmem:[%s193 + $0x1a4] sm:$0xf]
        %v306 = vld [vmem:[%s193 + $0x1a8] sm:$0xf]
        %v307 = vld [vmem:[%s193 + $0x1ac] sm:$0xf]
        %v308 = vld [vmem:[%s193 + $0x1b0] sm:$0xf]
        %v309 = vld [vmem:[%s193 + $0x1b4] sm:$0xf]
        %v310 = vld [vmem:[%s193 + $0x1b8] sm:$0xf]
        %v311 = vld [vmem:[%s193 + $0x1bc] sm:$0xf]
        %v312 = vld [vmem:[%s193 + $0x1c0] sm:$0xf]
        %v313 = vld [vmem:[%s193 + $0x1c4] sm:$0xf]
        %v314 = vld [vmem:[%s193 + $0x1c8] sm:$0xf]
        %v315 = vld [vmem:[%s193 + $0x1cc] sm:$0xf]
        %v316 = vld [vmem:[%s193 + $0x1d0] sm:$0xf]
        %v317 = vld [vmem:[%s193 + $0x1d4] sm:$0xf]
        %v318 = vld [vmem:[%s193 + $0x1d8] sm:$0xf]
        %v319 = vld [vmem:[%s193 + $0x1dc] sm:$0xf]
        %v320 = vld [vmem:[%s193 + $0x1e0] sm:$0xf]
        %v321 = vld [vmem:[%s193 + $0x1e4] sm:$0xf]
        %v322 = vld [vmem:[%s193 + $0x1e8] sm:$0xf]
        %v323 = vld [vmem:[%s193 + $0x1ec] sm:$0xf]
        %v324 = vld [vmem:[%s193 + $0x1f0] sm:$0xf]
        %v325 = vld [vmem:[%s193 + $0x1f4] sm:$0xf]
        %v326 = vld [vmem:[%s193 + $0x1f8] sm:$0xf]
        %v327 = vld [vmem:[%s193 + $0x1fc] sm:$0xf]
        %v328 = vld [vmem:[%s193 + $0x200] sm:$0xf]
        %v329 = vld [vmem:[%s193 + $0x204] sm:$0xf]
        %v330 = vld [vmem:[%s193 + $0x208] sm:$0xf]
        %v331 = vld [vmem:[%s193 + $0x20c] sm:$0xf]
        %v332 = vld [vmem:[%s193 + $0x210] sm:$0xf]
        %v333 = vld [vmem:[%s193 + $0x214] sm:$0xf]
        %v334 = vld [vmem:[%s193 + $0x218] sm:$0xf]
        %v335 = vld [vmem:[%s193 + $0x21c] sm:$0xf]
        %v336 = vld [vmem:[#allocation2] sm:$0xf]
        %v337 = vld [vmem:[#allocation2 + $0x4] sm:$0xf]
        %v338 = vld [vmem:[#allocation2 + $0x8] sm:$0xf]
        %v339 = vld [vmem:[#allocation2 + $0xc] sm:$0x3]
        %v340 = vld [vmem:[#allocation4] sm:$0x1]
        %v342 = vlaneseq
        %v343 = vshrl.u32 %v342, 7
        %v344 = vsub.s32 0, %v343
        %v345 = vrot.slane %v340, %v344
        %v483 = vunpack.c.l.b16 %v200
        %v484 = vunpack.c.l.b16 %v201
        %v485 = vunpack.c.l.b16 %v202
        %v486 = vunpack.c.l.b16 %v203
        %v487 = vunpack.c.l.b16 %v204
        %v488 = vunpack.c.l.b16 %v205
        %v489 = vunpack.c.l.b16 %v206
        %v490 = vunpack.c.l.b16 %v207
        %v491 = vunpack.c.l.b16 %v208
        %v492 = vunpack.c.l.b16 %v209
        %v493 = vunpack.c.l.b16 %v210
        %v494 = vunpack.c.l.b16 %v211
        %v495 = vunpack.c.l.b16 %v212
        %v496 = vunpack.c.l.b16 %v213
        %v497 = vunpack.c.l.b16 %v214
        %v498 = vunpack.c.l.b16 %v215
        %v499 = vunpack.c.l.b16 %v216
        %v500 = vunpack.c.l.b16 %v217
        %v501 = vunpack.c.l.b16 %v218
        %v502 = vunpack.c.l.b16 %v219
        %v503 = vunpack.c.l.b16 %v220
        %v504 = vunpack.c.l.b16 %v221
        %v505 = vunpack.c.l.b16 %v222
        %v506 = vunpack.c.l.b16 %v223
        %v507 = vunpack.c.l.b16 %v224
        %v508 = vunpack.c.l.b16 %v225
        %v509 = vunpack.c.l.b16 %v226
        %v510 = vunpack.c.l.b16 %v227
        %v511 = vunpack.c.l.b16 %v228
        %v512 = vunpack.c.l.b16 %v229
        %v513 = vunpack.c.l.b16 %v230
        %v514 = vunpack.c.l.b16 %v231
        %v515 = vunpack.c.l.b16 %v232
        %v516 = vunpack.c.l.b16 %v233
        %v517 = vunpack.c.l.b16 %v234
        %v518 = vunpack.c.l.b16 %v235
        %v519 = vunpack.c.l.b16 %v236
        %v520 = vunpack.c.l.b16 %v237
        %v521 = vunpack.c.l.b16 %v238
        %v522 = vunpack.c.l.b16 %v239
        %v523 = vunpack.c.l.b16 %v240
        %v524 = vunpack.c.l.b16 %v241
        %v525 = vunpack.c.l.b16 %v242
        %v526 = vunpack.c.l.b16 %v243
        %v527 = vunpack.c.l.b16 %v244
        %v528 = vunpack.c.l.b16 %v245
        %v529 = vunpack.c.l.b16 %v246
        %v530 = vunpack.c.l.b16 %v247
        %v531 = vunpack.c.l.b16 %v248
        %v532 = vunpack.c.l.b16 %v249
        %v533 = vunpack.c.l.b16 %v250
        %v534 = vunpack.c.l.b16 %v251
        %v535 = vunpack.c.l.b16 %v252
        %v536 = vunpack.c.l.b16 %v253
        %v537 = vunpack.c.l.b16 %v254
        %v538 = vunpack.c.l.b16 %v255
        %v539 = vunpack.c.l.b16 %v256
        %v540 = vunpack.c.l.b16 %v257
        %v541 = vunpack.c.l.b16 %v258
        %v542 = vunpack.c.l.b16 %v259
        %v543 = vunpack.c.l.b16 %v260
        %v544 = vunpack.c.l.b16 %v261
        %v545 = vunpack.c.l.b16 %v262
        %v546 = vunpack.c.l.b16 %v263
        %v547 = vunpack.c.l.b16 %v264
        %v548 = vunpack.c.l.b16 %v265
        %v549 = vunpack.c.l.b16 %v266
        %v550 = vunpack.c.l.b16 %v267
        %v551 = vunpack.c.l.b16 %v268
        %v552 = vunpack.c.l.b16 %v269
        %v553 = vunpack.c.l.b16 %v270
        %v554 = vunpack.c.l.b16 %v271
        %v555 = vunpack.c.l.b16 %v272
        %v556 = vunpack.c.l.b16 %v273
        %v557 = vunpack.c.l.b16 %v274
        %v558 = vunpack.c.l.b16 %v275
        %v559 = vunpack.c.l.b16 %v276
        %v560 = vunpack.c.l.b16 %v277
        %v561 = vunpack.c.l.b16 %v278
        %v562 = vunpack.c.l.b16 %v279
        %v563 = vunpack.c.l.b16 %v280
        %v564 = vunpack.c.l.b16 %v281
        %v565 = vunpack.c.l.b16 %v282
        %v566 = vunpack.c.l.b16 %v283
        %v567 = vunpack.c.l.b16 %v284
        %v568 = vunpack.c.l.b16 %v285
        %v569 = vunpack.c.l.b16 %v286
        %v570 = vunpack.c.l.b16 %v287
        %v571 = vunpack.c.l.b16 %v288
        %v572 = vunpack.c.l.b16 %v289
        %v573 = vunpack.c.l.b16 %v290
        %v574 = vunpack.c.l.b16 %v291
        %v575 = vunpack.c.l.b16 %v292
        %v576 = vunpack.c.l.b16 %v293
        %v577 = vunpack.c.l.b16 %v294
        %v578 = vunpack.c.l.b16 %v295
        %v579 = vunpack.c.l.b16 %v296
        %v580 = vunpack.c.l.b16 %v297
        %v581 = vunpack.c.l.b16 %v298
        %v582 = vunpack.c.l.b16 %v299
        %v583 = vunpack.c.l.b16 %v300
        %v584 = vunpack.c.l.b16 %v301
        %v585 = vunpack.c.l.b16 %v302
        %v586 = vunpack.c.l.b16 %v303
        %v587 = vunpack.c.l.b16 %v304
        %v588 = vunpack.c.l.b16 %v305
        %v589 = vunpack.c.l.b16 %v306
        %v590 = vunpack.c.l.b16 %v307
        %v591 = vunpack.c.l.b16 %v308
        %v592 = vunpack.c.l.b16 %v309
        %v593 = vunpack.c.l.b16 %v310
        %v594 = vunpack.c.l.b16 %v311
        %v595 = vunpack.c.l.b16 %v312
        %v596 = vunpack.c.l.b16 %v313
        %v597 = vunpack.c.l.b16 %v314
        %v598 = vunpack.c.l.b16 %v315
        %v599 = vunpack.c.l.b16 %v316
        %v600 = vunpack.c.l.b16 %v317
        %v601 = vunpack.c.l.b16 %v318
        %v602 = vunpack.c.l.b16 %v319
        %v603 = vunpack.c.l.b16 %v320
        %v604 = vunpack.c.l.b16 %v321
        %v605 = vunpack.c.l.b16 %v322
        %v606 = vunpack.c.l.b16 %v323
        %v607 = vunpack.c.l.b16 %v324
        %v608 = vunpack.c.l.b16 %v325
        %v609 = vunpack.c.l.b16 %v326
        %v610 = vunpack.c.l.b16 %v327
        %v611 = vunpack.c.l.b16 %v328
        %v612 = vunpack.c.l.b16 %v329
        %v613 = vunpack.c.l.b16 %v330
        %v614 = vunpack.c.l.b16 %v331
        %v615 = vunpack.c.l.b16 %v332
        %v616 = vunpack.c.l.b16 %v333
        %v617 = vunpack.c.l.b16 %v334
        %v618 = vunpack.c.l.b16 %v335
        %v619 = vpack.c.b16 %v484, %v483
        %v620 = vpack.c.b16 %v486, %v485
        %v621 = vpack.c.b16 %v488, %v487
        %v622 = vpack.c.b16 %v490, %v489
        %v623 = vpack.c.b16 %v492, %v491
        %v624 = vpack.c.b16 %v494, %v493
        %v625 = vpack.c.b16 %v496, %v495
        %v626 = vpack.c.b16 %v498, %v497
        %v627 = vpack.c.b16 %v500, %v499
        %v628 = vpack.c.b16 %v502, %v501
        %v629 = vpack.c.b16 %v504, %v503
        %v630 = vpack.c.b16 %v506, %v505
        %v631 = vpack.c.b16 %v508, %v507
        %v632 = vpack.c.b16 %v510, %v509
        %v633 = vpack.c.b16 %v512, %v511
        %v634 = vpack.c.b16 %v514, %v513
        %v635 = vpack.c.b16 %v516, %v515
        %v636 = vpack.c.b16 %v518, %v517
        %v637 = vpack.c.b16 %v520, %v519
        %v638 = vpack.c.b16 %v522, %v521
        %v639 = vpack.c.b16 %v524, %v523
        %v640 = vpack.c.b16 %v526, %v525
        %v641 = vpack.c.b16 %v528, %v527
        %v642 = vpack.c.b16 %v530, %v529
        %v643 = vpack.c.b16 %v532, %v531
        %v644 = vpack.c.b16 %v534, %v533
        %v645 = vpack.c.b16 %v536, %v535
        %v646 = vpack.c.b16 %v538, %v537
        %v647 = vpack.c.b16 %v540, %v539
        %v648 = vpack.c.b16 %v542, %v541
        %v649 = vpack.c.b16 %v544, %v543
        %v650 = vpack.c.b16 %v546, %v545
        %v651 = vpack.c.b16 %v548, %v547
        %v652 = vpack.c.b16 %v550, %v549
        %v653 = vpack.c.b16 %v552, %v551
        %v654 = vpack.c.b16 %v554, %v553
        %v655 = vpack.c.b16 %v556, %v555
        %v656 = vpack.c.b16 %v558, %v557
        %v657 = vpack.c.b16 %v560, %v559
        %v658 = vpack.c.b16 %v562, %v561
        %v659 = vpack.c.b16 %v564, %v563
        %v660 = vpack.c.b16 %v566, %v565
        %v661 = vpack.c.b16 %v568, %v567
        %v662 = vpack.c.b16 %v570, %v569
        %v663 = vpack.c.b16 %v572, %v571
        %v664 = vpack.c.b16 %v574, %v573
        %v665 = vpack.c.b16 %v576, %v575
        %v666 = vpack.c.b16 %v578, %v577
        %v667 = vpack.c.b16 %v580, %v579
        %v668 = vpack.c.b16 %v582, %v581
        %v669 = vpack.c.b16 %v584, %v583
        %v670 = vpack.c.b16 %v586, %v585
        %v671 = vpack.c.b16 %v588, %v587
        %v672 = vpack.c.b16 %v590, %v589
        %v673 = vpack.c.b16 %v592, %v591
        %v674 = vpack.c.b16 %v594, %v593
        %v675 = vpack.c.b16 %v596, %v595
        %v676 = vpack.c.b16 %v598, %v597
        %v677 = vpack.c.b16 %v600, %v599
        %v678 = vpack.c.b16 %v602, %v601
        %v679 = vpack.c.b16 %v604, %v603
        %v680 = vpack.c.b16 %v606, %v605
        %v681 = vpack.c.b16 %v608, %v607
        %v682 = vpack.c.b16 %v610, %v609
        %v683 = vpack.c.b16 %v612, %v611
        %v684 = vpack.c.b16 %v614, %v613
        %v685 = vpack.c.b16 %v616, %v615
        %v686 = vpack.c.b16 %v618, %v617
        %v691 = vunpack.c.l.b16 %v336
        %v692 = vunpack.c.l.b16 %v337
        %v693 = vunpack.c.l.b16 %v338
        %v694 = vunpack.c.l.b16 %v339
        %v695 = vpack.c.b16 %v692, %v691
        %v696 = vpack.c.b16 %v694, %v693
        %vm698 = vcmask 220160
        %v700 = vsel %vm698, %v619, 0
        %v703 = vsel %vm698, %v620, 0
        %v706 = vsel %vm698, %v621, 0
        %v709 = vsel %vm698, %v622, 0
        %v712 = vsel %vm698, %v623, 0
        %v715 = vsel %vm698, %v624, 0
        %v718 = vsel %vm698, %v625, 0
        %v721 = vsel %vm698, %v626, 0
        %v724 = vsel %vm698, %v627, 0
        %v727 = vsel %vm698, %v628, 0
        %v730 = vsel %vm698, %v629, 0
        %v733 = vsel %vm698, %v630, 0
        %v736 = vsel %vm698, %v631, 0
        %v739 = vsel %vm698, %v632, 0
        %v742 = vsel %vm698, %v633, 0
        %v745 = vsel %vm698, %v634, 0
        %v748 = vsel %vm698, %v635, 0
        %v751 = vsel %vm698, %v636, 0
        %v754 = vsel %vm698, %v637, 0
        %v757 = vsel %vm698, %v638, 0
        %v760 = vsel %vm698, %v639, 0
        %v763 = vsel %vm698, %v640, 0
        %v766 = vsel %vm698, %v641, 0
        %v769 = vsel %vm698, %v642, 0
        %v772 = vsel %vm698, %v643, 0
        %v775 = vsel %vm698, %v644, 0
        %v778 = vsel %vm698, %v645, 0
        %v781 = vsel %vm698, %v646, 0
        %v784 = vsel %vm698, %v647, 0
        %v787 = vsel %vm698, %v648, 0
        %v790 = vsel %vm698, %v649, 0
        %v793 = vsel %vm698, %v650, 0
        %v796 = vsel %vm698, %v651, 0
        %v799 = vsel %vm698, %v652, 0
        %v802 = vsel %vm698, %v653, 0
        %v805 = vsel %vm698, %v654, 0
        %v808 = vsel %vm698, %v655, 0
        %v811 = vsel %vm698, %v656, 0
        %v814 = vsel %vm698, %v657, 0
        %v817 = vsel %vm698, %v658, 0
        %v820 = vsel %vm698, %v659, 0
        %v823 = vsel %vm698, %v660, 0
        %v826 = vsel %vm698, %v661, 0
        %v829 = vsel %vm698, %v662, 0
        %v832 = vsel %vm698, %v663, 0
        %v835 = vsel %vm698, %v664, 0
        %v838 = vsel %vm698, %v665, 0
        %v841 = vsel %vm698, %v666, 0
        %v844 = vsel %vm698, %v667, 0
        %v847 = vsel %vm698, %v668, 0
        %v850 = vsel %vm698, %v669, 0
        %v853 = vsel %vm698, %v670, 0
        %v856 = vsel %vm698, %v671, 0
        %v859 = vsel %vm698, %v672, 0
        %v862 = vsel %vm698, %v673, 0
        %v865 = vsel %vm698, %v674, 0
        %v868 = vsel %vm698, %v675, 0
        %v871 = vsel %vm698, %v676, 0
        %v874 = vsel %vm698, %v677, 0
        %v877 = vsel %vm698, %v678, 0
        %v880 = vsel %vm698, %v679, 0
        %v883 = vsel %vm698, %v680, 0
        %v886 = vsel %vm698, %v681, 0
        %v889 = vsel %vm698, %v682, 0
        %v892 = vsel %vm698, %v683, 0
        %v895 = vsel %vm698, %v684, 0
        %v898 = vsel %vm698, %v685, 0
        %v901 = vsel %vm698, %v686, 0
        %vm903 = vcmask 1044480
        %vm904 = vcmask 1045504
        %v905 = vsel %vm903, 4294967295, 65535
        %v906 = vsel %vm904, %v905, 0
        %v908 = vand.u32 %v696, %v906
        %910 = vmatprep.subr.bf16.mxu0 0
        %911 = vmatpush1.bf16.msra.mxu0 0
        %912 = vmatprep.subr.bf16.mxu0 0
        %913 = vmatpush1.bf16.msra.mxu0 0
        %914 = vmatprep.subr.bf16.mxu0 0
        %915 = vmatpush1.bf16.msra.mxu0 0
        %916 = vmatprep.subr.bf16.mxu0 0
        %917 = vmatpush1.bf16.msra.mxu0 0
        %918 = vmatprep.subr.bf16.mxu0 0
        %919 = vmatpush1.bf16.msra.mxu0 0
        %920 = vmatprep.subr.bf16.mxu0 0
        %921 = vmatpush1.bf16.msra.mxu0 0
        %922 = vmatprep.subr.bf16.mxu0 0
        %923 = vmatpush1.bf16.msra.mxu0 %v908
        %924 = vmatprep.subr.bf16.mxu0 0
        %925 = vmatpush1.bf16.msra.mxu0 %v695
        %926 = vmatprep.subr.bf16.mxu0 0
        %927 = vmatpush2.bf16.msra.mxu0 0
        %928 = vmatprep.subr.bf16.mxu0 0
        %929 = vmatpush2.bf16.msra.mxu0 0
        %930 = vmatprep.subr.bf16.mxu0 0
        %931 = vmatpush2.bf16.msra.mxu0 0
        %932 = vmatprep.subr.bf16.mxu0 0
        %933 = vmatpush2.bf16.msra.mxu0 0
        %934 = vmatprep.subr.bf16.mxu0 0
        %935 = vmatpush2.bf16.msra.mxu0 0
        %936 = vmatprep.subr.bf16.mxu0 0
        %937 = vmatpush2.bf16.msra.mxu0 0
        %938 = vmatprep.subr.bf16.mxu0 0
        %939 = vmatpush2.bf16.msra.mxu0 0
        %940 = vmatprep.subr.bf16.mxu0 0
        %941 = vmatpush2.bf16.msra.mxu0 0
        %942 = vmatprep.mubr.bf16.mxu0 0
        %943 = vmatmul.mubr.bf16.gmra.mxu0 %v700
        %v944 = vpop.f32.mrf.mxu0
        %v945 = vadd.f32 %v345, %v944
        %v946 = vpop.f32.mrf.mxu0
        %v947 = vpop.f32.mrf.mxu0
        %v948 = vadd.f32 %v345, %v947
        %v949 = vpop.f32.mrf.mxu0
        %950 = vmatprep.mubr.bf16.mxu0 0
        %951 = vmatmul.mubr.bf16.gmra.mxu0 %v703
        %v952 = vpop.f32.mrf.mxu0
        %v953 = vadd.f32 %v345, %v952
        %v954 = vpop.f32.mrf.mxu0
        %v955 = vpop.f32.mrf.mxu0
        %v956 = vadd.f32 %v345, %v955
        %v957 = vpop.f32.mrf.mxu0
        %958 = vmatprep.mubr.bf16.mxu0 0
        %959 = vmatmul.mubr.bf16.gmra.mxu0 %v706
        %v960 = vpop.f32.mrf.mxu0
        %v961 = vadd.f32 %v345, %v960
        %v962 = vpop.f32.mrf.mxu0
        %v963 = vpop.f32.mrf.mxu0
        %v964 = vadd.f32 %v345, %v963
        %v965 = vpop.f32.mrf.mxu0
        %966 = vmatprep.mubr.bf16.mxu0 0
        %967 = vmatmul.mubr.bf16.gmra.mxu0 %v709
        %v968 = vpop.f32.mrf.mxu0
        %v969 = vadd.f32 %v345, %v968
        %v970 = vpop.f32.mrf.mxu0
        %v971 = vpop.f32.mrf.mxu0
        %v972 = vadd.f32 %v345, %v971
        %v973 = vpop.f32.mrf.mxu0
        %974 = vmatprep.mubr.bf16.mxu0 0
        %975 = vmatmul.mubr.bf16.gmra.mxu0 %v712
        %v976 = vpop.f32.mrf.mxu0
        %v977 = vadd.f32 %v345, %v976
        %v978 = vpop.f32.mrf.mxu0
        %v979 = vpop.f32.mrf.mxu0
        %v980 = vadd.f32 %v345, %v979
        %v981 = vpop.f32.mrf.mxu0
        %982 = vmatprep.mubr.bf16.mxu0 0
        %983 = vmatmul.mubr.bf16.gmra.mxu0 %v715
        %v984 = vpop.f32.mrf.mxu0
        %v985 = vadd.f32 %v345, %v984
        %v986 = vpop.f32.mrf.mxu0
        %v987 = vpop.f32.mrf.mxu0
        %v988 = vadd.f32 %v345, %v987
        %v989 = vpop.f32.mrf.mxu0
        %990 = vmatprep.mubr.bf16.mxu0 0
        %991 = vmatmul.mubr.bf16.gmra.mxu0 %v718
        %v992 = vpop.f32.mrf.mxu0
        %v993 = vadd.f32 %v345, %v992
        %v994 = vpop.f32.mrf.mxu0
        %v995 = vpop.f32.mrf.mxu0
        %v996 = vadd.f32 %v345, %v995
        %v997 = vpop.f32.mrf.mxu0
        %998 = vmatprep.mubr.bf16.mxu0 0
        %999 = vmatmul.mubr.bf16.gmra.mxu0 %v721
        %v1000 = vpop.f32.mrf.mxu0
        %v1001 = vadd.f32 %v345, %v1000
        %v1002 = vpop.f32.mrf.mxu0
        %v1003 = vpop.f32.mrf.mxu0
        %v1004 = vadd.f32 %v345, %v1003
        %v1005 = vpop.f32.mrf.mxu0
        %1006 = vmatprep.mubr.bf16.mxu0 0
        %1007 = vmatmul.mubr.bf16.gmra.mxu0 %v724
        %v1008 = vpop.f32.mrf.mxu0
        %v1009 = vadd.f32 %v345, %v1008
        %v1010 = vpop.f32.mrf.mxu0
        %v1011 = vpop.f32.mrf.mxu0
        %v1012 = vadd.f32 %v345, %v1011
        %v1013 = vpop.f32.mrf.mxu0
        %1014 = vmatprep.mubr.bf16.mxu0 0
        %1015 = vmatmul.mubr.bf16.gmra.mxu0 %v727
        %v1016 = vpop.f32.mrf.mxu0
        %v1017 = vadd.f32 %v345, %v1016
        %v1018 = vpop.f32.mrf.mxu0
        %v1019 = vpop.f32.mrf.mxu0
        %v1020 = vadd.f32 %v345, %v1019
        %v1021 = vpop.f32.mrf.mxu0
        %1022 = vmatprep.mubr.bf16.mxu0 0
        %1023 = vmatmul.mubr.bf16.gmra.mxu0 %v730
        %v1024 = vpop.f32.mrf.mxu0
        %v1025 = vadd.f32 %v345, %v1024
        %v1026 = vpop.f32.mrf.mxu0
        %v1027 = vpop.f32.mrf.mxu0
        %v1028 = vadd.f32 %v345, %v1027
        %v1029 = vpop.f32.mrf.mxu0
        %1030 = vmatprep.mubr.bf16.mxu0 0
        %1031 = vmatmul.mubr.bf16.gmra.mxu0 %v733
        %v1032 = vpop.f32.mrf.mxu0
        %v1033 = vadd.f32 %v345, %v1032
        %v1034 = vpop.f32.mrf.mxu0
        %v1035 = vpop.f32.mrf.mxu0
        %v1036 = vadd.f32 %v345, %v1035
        %v1037 = vpop.f32.mrf.mxu0
        %1038 = vmatprep.mubr.bf16.mxu0 0
        %1039 = vmatmul.mubr.bf16.gmra.mxu0 %v736
        %v1040 = vpop.f32.mrf.mxu0
        %v1041 = vadd.f32 %v345, %v1040
        %v1042 = vpop.f32.mrf.mxu0
        %v1043 = vpop.f32.mrf.mxu0
        %v1044 = vadd.f32 %v345, %v1043
        %v1045 = vpop.f32.mrf.mxu0
        %1046 = vmatprep.mubr.bf16.mxu0 0
        %1047 = vmatmul.mubr.bf16.gmra.mxu0 %v739
        %v1048 = vpop.f32.mrf.mxu0
        %v1049 = vadd.f32 %v345, %v1048
        %v1050 = vpop.f32.mrf.mxu0
        %v1051 = vpop.f32.mrf.mxu0
        %v1052 = vadd.f32 %v345, %v1051
        %v1053 = vpop.f32.mrf.mxu0
        %1054 = vmatprep.mubr.bf16.mxu0 0
        %1055 = vmatmul.mubr.bf16.gmra.mxu0 %v742
        %v1056 = vpop.f32.mrf.mxu0
        %v1057 = vadd.f32 %v345, %v1056
        %v1058 = vpop.f32.mrf.mxu0
        %v1059 = vpop.f32.mrf.mxu0
        %v1060 = vadd.f32 %v345, %v1059
        %v1061 = vpop.f32.mrf.mxu0
        %1062 = vmatprep.mubr.bf16.mxu0 0
        %1063 = vmatmul.mubr.bf16.gmra.mxu0 %v745
        %v1064 = vpop.f32.mrf.mxu0
        %v1065 = vadd.f32 %v345, %v1064
        %v1066 = vpop.f32.mrf.mxu0
        %v1067 = vpop.f32.mrf.mxu0
        %v1068 = vadd.f32 %v345, %v1067
        %v1069 = vpop.f32.mrf.mxu0
        %1070 = vmatprep.mubr.bf16.mxu0 0
        %1071 = vmatmul.mubr.bf16.gmra.mxu0 %v748
        %v1072 = vpop.f32.mrf.mxu0
        %v1073 = vadd.f32 %v345, %v1072
        %v1074 = vpop.f32.mrf.mxu0
        %v1075 = vpop.f32.mrf.mxu0
        %v1076 = vadd.f32 %v345, %v1075
        %v1077 = vpop.f32.mrf.mxu0
        %1078 = vmatprep.mubr.bf16.mxu0 0
        %1079 = vmatmul.mubr.bf16.gmra.mxu0 %v751
        %v1080 = vpop.f32.mrf.mxu0
        %v1081 = vadd.f32 %v345, %v1080
        %v1082 = vpop.f32.mrf.mxu0
        %v1083 = vpop.f32.mrf.mxu0
        %v1084 = vadd.f32 %v345, %v1083
        %v1085 = vpop.f32.mrf.mxu0
        %1086 = vmatprep.mubr.bf16.mxu0 0
        %1087 = vmatmul.mubr.bf16.gmra.mxu0 %v754
        %v1088 = vpop.f32.mrf.mxu0
        %v1089 = vadd.f32 %v345, %v1088
        %v1090 = vpop.f32.mrf.mxu0
        %v1091 = vpop.f32.mrf.mxu0
        %v1092 = vadd.f32 %v345, %v1091
        %v1093 = vpop.f32.mrf.mxu0
        %1094 = vmatprep.mubr.bf16.mxu0 0
        %1095 = vmatmul.mubr.bf16.gmra.mxu0 %v757
        %v1096 = vpop.f32.mrf.mxu0
        %v1097 = vadd.f32 %v345, %v1096
        %v1098 = vpop.f32.mrf.mxu0
        %v1099 = vpop.f32.mrf.mxu0
        %v1100 = vadd.f32 %v345, %v1099
        %v1101 = vpop.f32.mrf.mxu0
        %1102 = vmatprep.mubr.bf16.mxu0 0
        %1103 = vmatmul.mubr.bf16.gmra.mxu0 %v760
        %v1104 = vpop.f32.mrf.mxu0
        %v1105 = vadd.f32 %v345, %v1104
        %v1106 = vpop.f32.mrf.mxu0
        %v1107 = vpop.f32.mrf.mxu0
        %v1108 = vadd.f32 %v345, %v1107
        %v1109 = vpop.f32.mrf.mxu0
        %1110 = vmatprep.mubr.bf16.mxu0 0
        %1111 = vmatmul.mubr.bf16.gmra.mxu0 %v763
        %v1112 = vpop.f32.mrf.mxu0
        %v1113 = vadd.f32 %v345, %v1112
        %v1114 = vpop.f32.mrf.mxu0
        %v1115 = vpop.f32.mrf.mxu0
        %v1116 = vadd.f32 %v345, %v1115
        %v1117 = vpop.f32.mrf.mxu0
        %1118 = vmatprep.mubr.bf16.mxu0 0
        %1119 = vmatmul.mubr.bf16.gmra.mxu0 %v766
        %v1120 = vpop.f32.mrf.mxu0
        %v1121 = vadd.f32 %v345, %v1120
        %v1122 = vpop.f32.mrf.mxu0
        %v1123 = vpop.f32.mrf.mxu0
        %v1124 = vadd.f32 %v345, %v1123
        %v1125 = vpop.f32.mrf.mxu0
        %1126 = vmatprep.mubr.bf16.mxu0 0
        %1127 = vmatmul.mubr.bf16.gmra.mxu0 %v769
        %v1128 = vpop.f32.mrf.mxu0
        %v1129 = vadd.f32 %v345, %v1128
        %v1130 = vpop.f32.mrf.mxu0
        %v1131 = vpop.f32.mrf.mxu0
        %v1132 = vadd.f32 %v345, %v1131
        %v1133 = vpop.f32.mrf.mxu0
        %1134 = vmatprep.mubr.bf16.mxu0 0
        %1135 = vmatmul.mubr.bf16.gmra.mxu0 %v772
        %v1136 = vpop.f32.mrf.mxu0
        %v1137 = vadd.f32 %v345, %v1136
        %v1138 = vpop.f32.mrf.mxu0
        %v1139 = vpop.f32.mrf.mxu0
        %v1140 = vadd.f32 %v345, %v1139
        %v1141 = vpop.f32.mrf.mxu0
        %1142 = vmatprep.mubr.bf16.mxu0 0
        %1143 = vmatmul.mubr.bf16.gmra.mxu0 %v775
        %v1144 = vpop.f32.mrf.mxu0
        %v1145 = vadd.f32 %v345, %v1144
        %v1146 = vpop.f32.mrf.mxu0
        %v1147 = vpop.f32.mrf.mxu0
        %v1148 = vadd.f32 %v345, %v1147
        %v1149 = vpop.f32.mrf.mxu0
        %1150 = vmatprep.mubr.bf16.mxu0 0
        %1151 = vmatmul.mubr.bf16.gmra.mxu0 %v778
        %v1152 = vpop.f32.mrf.mxu0
        %v1153 = vadd.f32 %v345, %v1152
        %v1154 = vpop.f32.mrf.mxu0
        %v1155 = vpop.f32.mrf.mxu0
        %v1156 = vadd.f32 %v345, %v1155
        %v1157 = vpop.f32.mrf.mxu0
        %1158 = vmatprep.mubr.bf16.mxu0 0
        %1159 = vmatmul.mubr.bf16.gmra.mxu0 %v781
        %v1160 = vpop.f32.mrf.mxu0
        %v1161 = vadd.f32 %v345, %v1160
        %v1162 = vpop.f32.mrf.mxu0
        %v1163 = vpop.f32.mrf.mxu0
        %v1164 = vadd.f32 %v345, %v1163
        %v1165 = vpop.f32.mrf.mxu0
        %1166 = vmatprep.mubr.bf16.mxu0 0
        %1167 = vmatmul.mubr.bf16.gmra.mxu0 %v784
        %v1168 = vpop.f32.mrf.mxu0
        %v1169 = vadd.f32 %v345, %v1168
        %v1170 = vpop.f32.mrf.mxu0
        %v1171 = vpop.f32.mrf.mxu0
        %v1172 = vadd.f32 %v345, %v1171
        %v1173 = vpop.f32.mrf.mxu0
        %1174 = vmatprep.mubr.bf16.mxu0 0
        %1175 = vmatmul.mubr.bf16.gmra.mxu0 %v787
        %v1176 = vpop.f32.mrf.mxu0
        %v1177 = vadd.f32 %v345, %v1176
        %v1178 = vpop.f32.mrf.mxu0
        %v1179 = vpop.f32.mrf.mxu0
        %v1180 = vadd.f32 %v345, %v1179
        %v1181 = vpop.f32.mrf.mxu0
        %1182 = vmatprep.mubr.bf16.mxu0 0
        %1183 = vmatmul.mubr.bf16.gmra.mxu0 %v790
        %v1184 = vpop.f32.mrf.mxu0
        %v1185 = vadd.f32 %v345, %v1184
        %v1186 = vpop.f32.mrf.mxu0
        %v1187 = vpop.f32.mrf.mxu0
        %v1188 = vadd.f32 %v345, %v1187
        %v1189 = vpop.f32.mrf.mxu0
        %1190 = vmatprep.mubr.bf16.mxu0 0
        %1191 = vmatmul.mubr.bf16.gmra.mxu0 %v793
        %v1192 = vpop.f32.mrf.mxu0
        %v1193 = vadd.f32 %v345, %v1192
        %v1194 = vpop.f32.mrf.mxu0
        %v1195 = vpop.f32.mrf.mxu0
        %v1196 = vadd.f32 %v345, %v1195
        %v1197 = vpop.f32.mrf.mxu0
        %1198 = vmatprep.mubr.bf16.mxu0 0
        %1199 = vmatmul.mubr.bf16.gmra.mxu0 %v796
        %v1200 = vpop.f32.mrf.mxu0
        %v1201 = vadd.f32 %v345, %v1200
        %v1202 = vpop.f32.mrf.mxu0
        %v1203 = vpop.f32.mrf.mxu0
        %v1204 = vadd.f32 %v345, %v1203
        %v1205 = vpop.f32.mrf.mxu0
        %1206 = vmatprep.mubr.bf16.mxu0 0
        %1207 = vmatmul.mubr.bf16.gmra.mxu0 %v799
        %v1208 = vpop.f32.mrf.mxu0
        %v1209 = vadd.f32 %v345, %v1208
        %v1210 = vpop.f32.mrf.mxu0
        %v1211 = vpop.f32.mrf.mxu0
        %v1212 = vadd.f32 %v345, %v1211
        %v1213 = vpop.f32.mrf.mxu0
        %1214 = vmatprep.mubr.bf16.mxu0 0
        %1215 = vmatmul.mubr.bf16.gmra.mxu0 %v802
        %v1216 = vpop.f32.mrf.mxu0
        %v1217 = vadd.f32 %v345, %v1216
        %v1218 = vpop.f32.mrf.mxu0
        %v1219 = vpop.f32.mrf.mxu0
        %v1220 = vadd.f32 %v345, %v1219
        %v1221 = vpop.f32.mrf.mxu0
        %1222 = vmatprep.mubr.bf16.mxu0 0
        %1223 = vmatmul.mubr.bf16.gmra.mxu0 %v805
        %v1224 = vpop.f32.mrf.mxu0
        %v1225 = vadd.f32 %v345, %v1224
        %v1226 = vpop.f32.mrf.mxu0
        %v1227 = vpop.f32.mrf.mxu0
        %v1228 = vadd.f32 %v345, %v1227
        %v1229 = vpop.f32.mrf.mxu0
        %1230 = vmatprep.mubr.bf16.mxu0 0
        %1231 = vmatmul.mubr.bf16.gmra.mxu0 %v808
        %v1232 = vpop.f32.mrf.mxu0
        %v1233 = vadd.f32 %v345, %v1232
        %v1234 = vpop.f32.mrf.mxu0
        %v1235 = vpop.f32.mrf.mxu0
        %v1236 = vadd.f32 %v345, %v1235
        %v1237 = vpop.f32.mrf.mxu0
        %1238 = vmatprep.mubr.bf16.mxu0 0
        %1239 = vmatmul.mubr.bf16.gmra.mxu0 %v811
        %v1240 = vpop.f32.mrf.mxu0
        %v1241 = vadd.f32 %v345, %v1240
        %v1242 = vpop.f32.mrf.mxu0
        %v1243 = vpop.f32.mrf.mxu0
        %v1244 = vadd.f32 %v345, %v1243
        %v1245 = vpop.f32.mrf.mxu0
        %1246 = vmatprep.mubr.bf16.mxu0 0
        %1247 = vmatmul.mubr.bf16.gmra.mxu0 %v814
        %v1248 = vpop.f32.mrf.mxu0
        %v1249 = vadd.f32 %v345, %v1248
        %v1250 = vpop.f32.mrf.mxu0
        %v1251 = vpop.f32.mrf.mxu0
        %v1252 = vadd.f32 %v345, %v1251
        %v1253 = vpop.f32.mrf.mxu0
        %1254 = vmatprep.mubr.bf16.mxu0 0
        %1255 = vmatmul.mubr.bf16.gmra.mxu0 %v817
        %v1256 = vpop.f32.mrf.mxu0
        %v1257 = vadd.f32 %v345, %v1256
        %v1258 = vpop.f32.mrf.mxu0
        %v1259 = vpop.f32.mrf.mxu0
        %v1260 = vadd.f32 %v345, %v1259
        %v1261 = vpop.f32.mrf.mxu0
        %1262 = vmatprep.mubr.bf16.mxu0 0
        %1263 = vmatmul.mubr.bf16.gmra.mxu0 %v820
        %v1264 = vpop.f32.mrf.mxu0
        %v1265 = vadd.f32 %v345, %v1264
        %v1266 = vpop.f32.mrf.mxu0
        %v1267 = vpop.f32.mrf.mxu0
        %v1268 = vadd.f32 %v345, %v1267
        %v1269 = vpop.f32.mrf.mxu0
        %1270 = vmatprep.mubr.bf16.mxu0 0
        %1271 = vmatmul.mubr.bf16.gmra.mxu0 %v823
        %v1272 = vpop.f32.mrf.mxu0
        %v1273 = vadd.f32 %v345, %v1272
        %v1274 = vpop.f32.mrf.mxu0
        %v1275 = vpop.f32.mrf.mxu0
        %v1276 = vadd.f32 %v345, %v1275
        %v1277 = vpop.f32.mrf.mxu0
        %1278 = vmatprep.mubr.bf16.mxu0 0
        %1279 = vmatmul.mubr.bf16.gmra.mxu0 %v826
        %v1280 = vpop.f32.mrf.mxu0
        %v1281 = vadd.f32 %v345, %v1280
        %v1282 = vpop.f32.mrf.mxu0
        %v1283 = vpop.f32.mrf.mxu0
        %v1284 = vadd.f32 %v345, %v1283
        %v1285 = vpop.f32.mrf.mxu0
        %1286 = vmatprep.mubr.bf16.mxu0 0
        %1287 = vmatmul.mubr.bf16.gmra.mxu0 %v829
        %v1288 = vpop.f32.mrf.mxu0
        %v1289 = vadd.f32 %v345, %v1288
        %v1290 = vpop.f32.mrf.mxu0
        %v1291 = vpop.f32.mrf.mxu0
        %v1292 = vadd.f32 %v345, %v1291
        %v1293 = vpop.f32.mrf.mxu0
        %1294 = vmatprep.mubr.bf16.mxu0 0
        %1295 = vmatmul.mubr.bf16.gmra.mxu0 %v832
        %v1296 = vpop.f32.mrf.mxu0
        %v1297 = vadd.f32 %v345, %v1296
        %v1298 = vpop.f32.mrf.mxu0
        %v1299 = vpop.f32.mrf.mxu0
        %v1300 = vadd.f32 %v345, %v1299
        %v1301 = vpop.f32.mrf.mxu0
        %1302 = vmatprep.mubr.bf16.mxu0 0
        %1303 = vmatmul.mubr.bf16.gmra.mxu0 %v835
        %v1304 = vpop.f32.mrf.mxu0
        %v1305 = vadd.f32 %v345, %v1304
        %v1306 = vpop.f32.mrf.mxu0
        %v1307 = vpop.f32.mrf.mxu0
        %v1308 = vadd.f32 %v345, %v1307
        %v1309 = vpop.f32.mrf.mxu0
        %1310 = vmatprep.mubr.bf16.mxu0 0
        %1311 = vmatmul.mubr.bf16.gmra.mxu0 %v838
        %v1312 = vpop.f32.mrf.mxu0
        %v1313 = vadd.f32 %v345, %v1312
        %v1314 = vpop.f32.mrf.mxu0
        %v1315 = vpop.f32.mrf.mxu0
        %v1316 = vadd.f32 %v345, %v1315
        %v1317 = vpop.f32.mrf.mxu0
        %1318 = vmatprep.mubr.bf16.mxu0 0
        %1319 = vmatmul.mubr.bf16.gmra.mxu0 %v841
        %v1320 = vpop.f32.mrf.mxu0
        %v1321 = vadd.f32 %v345, %v1320
        %v1322 = vpop.f32.mrf.mxu0
        %v1323 = vpop.f32.mrf.mxu0
        %v1324 = vadd.f32 %v345, %v1323
        %v1325 = vpop.f32.mrf.mxu0
        %1326 = vmatprep.mubr.bf16.mxu0 0
        %1327 = vmatmul.mubr.bf16.gmra.mxu0 %v844
        %v1328 = vpop.f32.mrf.mxu0
        %v1329 = vadd.f32 %v345, %v1328
        %v1330 = vpop.f32.mrf.mxu0
        %v1331 = vpop.f32.mrf.mxu0
        %v1332 = vadd.f32 %v345, %v1331
        %v1333 = vpop.f32.mrf.mxu0
        %1334 = vmatprep.mubr.bf16.mxu0 0
        %1335 = vmatmul.mubr.bf16.gmra.mxu0 %v847
        %v1336 = vpop.f32.mrf.mxu0
        %v1337 = vadd.f32 %v345, %v1336
        %v1338 = vpop.f32.mrf.mxu0
        %v1339 = vpop.f32.mrf.mxu0
        %v1340 = vadd.f32 %v345, %v1339
        %v1341 = vpop.f32.mrf.mxu0
        %1342 = vmatprep.mubr.bf16.mxu0 0
        %1343 = vmatmul.mubr.bf16.gmra.mxu0 %v850
        %v1344 = vpop.f32.mrf.mxu0
        %v1345 = vadd.f32 %v345, %v1344
        %v1346 = vpop.f32.mrf.mxu0
        %v1347 = vpop.f32.mrf.mxu0
        %v1348 = vadd.f32 %v345, %v1347
        %v1349 = vpop.f32.mrf.mxu0
        %1350 = vmatprep.mubr.bf16.mxu0 0
        %1351 = vmatmul.mubr.bf16.gmra.mxu0 %v853
        %v1352 = vpop.f32.mrf.mxu0
        %v1353 = vadd.f32 %v345, %v1352
        %v1354 = vpop.f32.mrf.mxu0
        %v1355 = vpop.f32.mrf.mxu0
        %v1356 = vadd.f32 %v345, %v1355
        %v1357 = vpop.f32.mrf.mxu0
        %1358 = vmatprep.mubr.bf16.mxu0 0
        %1359 = vmatmul.mubr.bf16.gmra.mxu0 %v856
        %v1360 = vpop.f32.mrf.mxu0
        %v1361 = vadd.f32 %v345, %v1360
        %v1362 = vpop.f32.mrf.mxu0
        %v1363 = vpop.f32.mrf.mxu0
        %v1364 = vadd.f32 %v345, %v1363
        %v1365 = vpop.f32.mrf.mxu0
        %1366 = vmatprep.mubr.bf16.mxu0 0
        %1367 = vmatmul.mubr.bf16.gmra.mxu0 %v859
        %v1368 = vpop.f32.mrf.mxu0
        %v1369 = vadd.f32 %v345, %v1368
        %v1370 = vpop.f32.mrf.mxu0
        %v1371 = vpop.f32.mrf.mxu0
        %v1372 = vadd.f32 %v345, %v1371
        %v1373 = vpop.f32.mrf.mxu0
        %1374 = vmatprep.mubr.bf16.mxu0 0
        %1375 = vmatmul.mubr.bf16.gmra.mxu0 %v862
        %v1376 = vpop.f32.mrf.mxu0
        %v1377 = vadd.f32 %v345, %v1376
        %v1378 = vpop.f32.mrf.mxu0
        %v1379 = vpop.f32.mrf.mxu0
        %v1380 = vadd.f32 %v345, %v1379
        %v1381 = vpop.f32.mrf.mxu0
        %1382 = vmatprep.mubr.bf16.mxu0 0
        %1383 = vmatmul.mubr.bf16.gmra.mxu0 %v865
        %v1384 = vpop.f32.mrf.mxu0
        %v1385 = vadd.f32 %v345, %v1384
        %v1386 = vpop.f32.mrf.mxu0
        %v1387 = vpop.f32.mrf.mxu0
        %v1388 = vadd.f32 %v345, %v1387
        %v1389 = vpop.f32.mrf.mxu0
        %1390 = vmatprep.mubr.bf16.mxu0 0
        %1391 = vmatmul.mubr.bf16.gmra.mxu0 %v868
        %v1392 = vpop.f32.mrf.mxu0
        %v1393 = vadd.f32 %v345, %v1392
        %v1394 = vpop.f32.mrf.mxu0
        %v1395 = vpop.f32.mrf.mxu0
        %v1396 = vadd.f32 %v345, %v1395
        %v1397 = vpop.f32.mrf.mxu0
        %1398 = vmatprep.mubr.bf16.mxu0 0
        %1399 = vmatmul.mubr.bf16.gmra.mxu0 %v871
        %v1400 = vpop.f32.mrf.mxu0
        %v1401 = vadd.f32 %v345, %v1400
        %v1402 = vpop.f32.mrf.mxu0
        %v1403 = vpop.f32.mrf.mxu0
        %v1404 = vadd.f32 %v345, %v1403
        %v1405 = vpop.f32.mrf.mxu0
        %1406 = vmatprep.mubr.bf16.mxu0 0
        %1407 = vmatmul.mubr.bf16.gmra.mxu0 %v874
        %v1408 = vpop.f32.mrf.mxu0
        %v1409 = vadd.f32 %v345, %v1408
        %v1410 = vpop.f32.mrf.mxu0
        %v1411 = vpop.f32.mrf.mxu0
        %v1412 = vadd.f32 %v345, %v1411
        %v1413 = vpop.f32.mrf.mxu0
        %1414 = vmatprep.mubr.bf16.mxu0 0
        %1415 = vmatmul.mubr.bf16.gmra.mxu0 %v877
        %v1416 = vpop.f32.mrf.mxu0
        %v1417 = vadd.f32 %v345, %v1416
        %v1418 = vpop.f32.mrf.mxu0
        %v1419 = vpop.f32.mrf.mxu0
        %v1420 = vadd.f32 %v345, %v1419
        %v1421 = vpop.f32.mrf.mxu0
        %1422 = vmatprep.mubr.bf16.mxu0 0
        %1423 = vmatmul.mubr.bf16.gmra.mxu0 %v880
        %v1424 = vpop.f32.mrf.mxu0
        %v1425 = vadd.f32 %v345, %v1424
        %v1426 = vpop.f32.mrf.mxu0
        %v1427 = vpop.f32.mrf.mxu0
        %v1428 = vadd.f32 %v345, %v1427
        %v1429 = vpop.f32.mrf.mxu0
        %1430 = vmatprep.mubr.bf16.mxu0 0
        %1431 = vmatmul.mubr.bf16.gmra.mxu0 %v883
        %v1432 = vpop.f32.mrf.mxu0
        %v1433 = vadd.f32 %v345, %v1432
        %v1434 = vpop.f32.mrf.mxu0
        %v1435 = vpop.f32.mrf.mxu0
        %v1436 = vadd.f32 %v345, %v1435
        %v1437 = vpop.f32.mrf.mxu0
        %1438 = vmatprep.mubr.bf16.mxu0 0
        %1439 = vmatmul.mubr.bf16.gmra.mxu0 %v886
        %v1440 = vpop.f32.mrf.mxu0
        %v1441 = vadd.f32 %v345, %v1440
        %v1442 = vpop.f32.mrf.mxu0
        %v1443 = vpop.f32.mrf.mxu0
        %v1444 = vadd.f32 %v345, %v1443
        %v1445 = vpop.f32.mrf.mxu0
        %1446 = vmatprep.mubr.bf16.mxu0 0
        %1447 = vmatmul.mubr.bf16.gmra.mxu0 %v889
        %v1448 = vpop.f32.mrf.mxu0
        %v1449 = vadd.f32 %v345, %v1448
        %v1450 = vpop.f32.mrf.mxu0
        %v1451 = vpop.f32.mrf.mxu0
        %v1452 = vadd.f32 %v345, %v1451
        %v1453 = vpop.f32.mrf.mxu0
        %1454 = vmatprep.mubr.bf16.mxu0 0
        %1455 = vmatmul.mubr.bf16.gmra.mxu0 %v892
        %v1456 = vpop.f32.mrf.mxu0
        %v1457 = vadd.f32 %v345, %v1456
        %v1458 = vpop.f32.mrf.mxu0
        %v1459 = vpop.f32.mrf.mxu0
        %v1460 = vadd.f32 %v345, %v1459
        %v1461 = vpop.f32.mrf.mxu0
        %1462 = vmatprep.mubr.bf16.mxu0 0
        %1463 = vmatmul.mubr.bf16.gmra.mxu0 %v895
        %v1464 = vpop.f32.mrf.mxu0
        %v1465 = vadd.f32 %v345, %v1464
        %v1466 = vpop.f32.mrf.mxu0
        %v1467 = vpop.f32.mrf.mxu0
        %v1468 = vadd.f32 %v345, %v1467
        %v1469 = vpop.f32.mrf.mxu0
        %1470 = vmatprep.mubr.bf16.mxu0 0
        %1471 = vmatmul.mubr.bf16.gmra.mxu0 %v898
        %v1472 = vpop.f32.mrf.mxu0
        %v1473 = vadd.f32 %v345, %v1472
        %v1474 = vpop.f32.mrf.mxu0
        %v1475 = vpop.f32.mrf.mxu0
        %v1476 = vadd.f32 %v345, %v1475
        %v1477 = vpop.f32.mrf.mxu0
        %1478 = vmatprep.mubr.bf16.mxu0 0
        %1479 = vmatmul.mubr.bf16.gmra.mxu0 %v901
        %v1480 = vpop.f32.mrf.mxu0
        %v1481 = vadd.f32 %v345, %v1480
        %v1482 = vpop.f32.mrf.mxu0
        %v1483 = vpop.f32.mrf.mxu0
        %v1484 = vadd.f32 %v345, %v1483
        %v1485 = vpop.f32.mrf.mxu0
        %1486 = vdwg.mxu0
        %v1487 = vmax.f32 %v945, 0.0
        %v1488 = vmax.f32 %v948, 0.0
        %v1489 = vmax.f32 %v953, 0.0
        %v1490 = vmax.f32 %v956, 0.0
        %v1491 = vmax.f32 %v961, 0.0
        %v1492 = vmax.f32 %v964, 0.0
        %v1493 = vmax.f32 %v969, 0.0
        %v1494 = vmax.f32 %v972, 0.0
        %v1495 = vmax.f32 %v977, 0.0
        %v1496 = vmax.f32 %v980, 0.0
        %v1497 = vmax.f32 %v985, 0.0
        %v1498 = vmax.f32 %v988, 0.0
        %v1499 = vmax.f32 %v993, 0.0
        %v1500 = vmax.f32 %v996, 0.0
        %v1501 = vmax.f32 %v1001, 0.0
        %v1502 = vmax.f32 %v1004, 0.0
        %v1503 = vmax.f32 %v1009, 0.0
        %v1504 = vmax.f32 %v1012, 0.0
        %v1505 = vmax.f32 %v1017, 0.0
        %v1506 = vmax.f32 %v1020, 0.0
        %v1507 = vmax.f32 %v1025, 0.0
        %v1508 = vmax.f32 %v1028, 0.0
        %v1509 = vmax.f32 %v1033, 0.0
        %v1510 = vmax.f32 %v1036, 0.0
        %v1511 = vmax.f32 %v1041, 0.0
        %v1512 = vmax.f32 %v1044, 0.0
        %v1513 = vmax.f32 %v1049, 0.0
        %v1514 = vmax.f32 %v1052, 0.0
        %v1515 = vmax.f32 %v1057, 0.0
        %v1516 = vmax.f32 %v1060, 0.0
        %v1517 = vmax.f32 %v1065, 0.0
        %v1518 = vmax.f32 %v1068, 0.0
        %v1519 = vmax.f32 %v1073, 0.0
        %v1520 = vmax.f32 %v1076, 0.0
        %v1521 = vmax.f32 %v1081, 0.0
        %v1522 = vmax.f32 %v1084, 0.0
        %v1523 = vmax.f32 %v1089, 0.0
        %v1524 = vmax.f32 %v1092, 0.0
        %v1525 = vmax.f32 %v1097, 0.0
        %v1526 = vmax.f32 %v1100, 0.0
        %v1527 = vmax.f32 %v1105, 0.0
        %v1528 = vmax.f32 %v1108, 0.0
        %v1529 = vmax.f32 %v1113, 0.0
        %v1530 = vmax.f32 %v1116, 0.0
        %v1531 = vmax.f32 %v1121, 0.0
        %v1532 = vmax.f32 %v1124, 0.0
        %v1533 = vmax.f32 %v1129, 0.0
        %v1534 = vmax.f32 %v1132, 0.0
        %v1535 = vmax.f32 %v1137, 0.0
        %v1536 = vmax.f32 %v1140, 0.0
        %v1537 = vmax.f32 %v1145, 0.0
        %v1538 = vmax.f32 %v1148, 0.0
        %v1539 = vmax.f32 %v1153, 0.0
        %v1540 = vmax.f32 %v1156, 0.0
        %v1541 = vmax.f32 %v1161, 0.0
        %v1542 = vmax.f32 %v1164, 0.0
        %v1543 = vmax.f32 %v1169, 0.0
        %v1544 = vmax.f32 %v1172, 0.0
        %v1545 = vmax.f32 %v1177, 0.0
        %v1546 = vmax.f32 %v1180, 0.0
        %v1547 = vmax.f32 %v1185, 0.0
        %v1548 = vmax.f32 %v1188, 0.0
        %v1549 = vmax.f32 %v1193, 0.0
        %v1550 = vmax.f32 %v1196, 0.0
        %v1551 = vmax.f32 %v1201, 0.0
        %v1552 = vmax.f32 %v1204, 0.0
        %v1553 = vmax.f32 %v1209, 0.0
        %v1554 = vmax.f32 %v1212, 0.0
        %v1555 = vmax.f32 %v1217, 0.0
        %v1556 = vmax.f32 %v1220, 0.0
        %v1557 = vmax.f32 %v1225, 0.0
        %v1558 = vmax.f32 %v1228, 0.0
        %v1559 = vmax.f32 %v1233, 0.0
        %v1560 = vmax.f32 %v1236, 0.0
        %v1561 = vmax.f32 %v1241, 0.0
        %v1562 = vmax.f32 %v1244, 0.0
        %v1563 = vmax.f32 %v1249, 0.0
        %v1564 = vmax.f32 %v1252, 0.0
        %v1565 = vmax.f32 %v1257, 0.0
        %v1566 = vmax.f32 %v1260, 0.0
        %v1567 = vmax.f32 %v1265, 0.0
        %v1568 = vmax.f32 %v1268, 0.0
        %v1569 = vmax.f32 %v1273, 0.0
        %v1570 = vmax.f32 %v1276, 0.0
        %v1571 = vmax.f32 %v1281, 0.0
        %v1572 = vmax.f32 %v1284, 0.0
        %v1573 = vmax.f32 %v1289, 0.0
        %v1574 = vmax.f32 %v1292, 0.0
        %v1575 = vmax.f32 %v1297, 0.0
        %v1576 = vmax.f32 %v1300, 0.0
        %v1577 = vmax.f32 %v1305, 0.0
        %v1578 = vmax.f32 %v1308, 0.0
        %v1579 = vmax.f32 %v1313, 0.0
        %v1580 = vmax.f32 %v1316, 0.0
        %v1581 = vmax.f32 %v1321, 0.0
        %v1582 = vmax.f32 %v1324, 0.0
        %v1583 = vmax.f32 %v1329, 0.0
        %v1584 = vmax.f32 %v1332, 0.0
        %v1585 = vmax.f32 %v1337, 0.0
        %v1586 = vmax.f32 %v1340, 0.0
        %v1587 = vmax.f32 %v1345, 0.0
        %v1588 = vmax.f32 %v1348, 0.0
        %v1589 = vmax.f32 %v1353, 0.0
        %v1590 = vmax.f32 %v1356, 0.0
        %v1591 = vmax.f32 %v1361, 0.0
        %v1592 = vmax.f32 %v1364, 0.0
        %v1593 = vmax.f32 %v1369, 0.0
        %v1594 = vmax.f32 %v1372, 0.0
        %v1595 = vmax.f32 %v1377, 0.0
        %v1596 = vmax.f32 %v1380, 0.0
        %v1597 = vmax.f32 %v1385, 0.0
        %v1598 = vmax.f32 %v1388, 0.0
        %v1599 = vmax.f32 %v1393, 0.0
        %v1600 = vmax.f32 %v1396, 0.0
        %v1601 = vmax.f32 %v1401, 0.0
        %v1602 = vmax.f32 %v1404, 0.0
        %v1603 = vmax.f32 %v1409, 0.0
        %v1604 = vmax.f32 %v1412, 0.0
        %v1605 = vmax.f32 %v1417, 0.0
        %v1606 = vmax.f32 %v1420, 0.0
        %v1607 = vmax.f32 %v1425, 0.0
        %v1608 = vmax.f32 %v1428, 0.0
        %v1609 = vmax.f32 %v1433, 0.0
        %v1610 = vmax.f32 %v1436, 0.0
        %v1611 = vmax.f32 %v1441, 0.0
        %v1612 = vmax.f32 %v1444, 0.0
        %v1613 = vmax.f32 %v1449, 0.0
        %v1614 = vmax.f32 %v1452, 0.0
        %v1615 = vmax.f32 %v1457, 0.0
        %v1616 = vmax.f32 %v1460, 0.0
        %v1617 = vmax.f32 %v1465, 0.0
        %v1618 = vmax.f32 %v1468, 0.0
        %v1619 = vmax.f32 %v1473, 0.0
        %v1620 = vmax.f32 %v1476, 0.0
        %v1621 = vmax.f32 %v1481, 0.0
        %v1622 = vmax.f32 %v1484, 0.0
        %vm1623 = vcmask 523264
        %1624 = vst.msk [vmem:[%s198] sm:$0xff] %vm1623, %v1487
        %1625 = vst.msk [vmem:[%s198 + $0x8] sm:$0xff] %vm1623, %v1488
        %1626 = vst.msk [vmem:[%s198 + $0x10] sm:$0xff] %vm1623, %v1489
        %1627 = vst.msk [vmem:[%s198 + $0x18] sm:$0xff] %vm1623, %v1490
        %1628 = vst.msk [vmem:[%s198 + $0x20] sm:$0xff] %vm1623, %v1491
        %1629 = vst.msk [vmem:[%s198 + $0x28] sm:$0xff] %vm1623, %v1492
        %1630 = vst.msk [vmem:[%s198 + $0x30] sm:$0xff] %vm1623, %v1493
        %1631 = vst.msk [vmem:[%s198 + $0x38] sm:$0xff] %vm1623, %v1494
        %1632 = vst.msk [vmem:[%s198 + $0x40] sm:$0xff] %vm1623, %v1495
        %1633 = vst.msk [vmem:[%s198 + $0x48] sm:$0xff] %vm1623, %v1496
        %1634 = vst.msk [vmem:[%s198 + $0x50] sm:$0xff] %vm1623, %v1497
        %1635 = vst.msk [vmem:[%s198 + $0x58] sm:$0xff] %vm1623, %v1498
        %1636 = vst.msk [vmem:[%s198 + $0x60] sm:$0xff] %vm1623, %v1499
        %1637 = vst.msk [vmem:[%s198 + $0x68] sm:$0xff] %vm1623, %v1500
        %1638 = vst.msk [vmem:[%s198 + $0x70] sm:$0xff] %vm1623, %v1501
        %1639 = vst.msk [vmem:[%s198 + $0x78] sm:$0xff] %vm1623, %v1502
        %1640 = vst.msk [vmem:[%s198 + $0x80] sm:$0xff] %vm1623, %v1503
        %1641 = vst.msk [vmem:[%s198 + $0x88] sm:$0xff] %vm1623, %v1504
        %1642 = vst.msk [vmem:[%s198 + $0x90] sm:$0xff] %vm1623, %v1505
        %1643 = vst.msk [vmem:[%s198 + $0x98] sm:$0xff] %vm1623, %v1506
        %1644 = vst.msk [vmem:[%s198 + $0xa0] sm:$0xff] %vm1623, %v1507
        %1645 = vst.msk [vmem:[%s198 + $0xa8] sm:$0xff] %vm1623, %v1508
        %1646 = vst.msk [vmem:[%s198 + $0xb0] sm:$0xff] %vm1623, %v1509
        %1647 = vst.msk [vmem:[%s198 + $0xb8] sm:$0xff] %vm1623, %v1510
        %1648 = vst.msk [vmem:[%s198 + $0xc0] sm:$0xff] %vm1623, %v1511
        %1649 = vst.msk [vmem:[%s198 + $0xc8] sm:$0xff] %vm1623, %v1512
        %1650 = vst.msk [vmem:[%s198 + $0xd0] sm:$0xff] %vm1623, %v1513
        %1651 = vst.msk [vmem:[%s198 + $0xd8] sm:$0xff] %vm1623, %v1514
        %1652 = vst.msk [vmem:[%s198 + $0xe0] sm:$0xff] %vm1623, %v1515
        %1653 = vst.msk [vmem:[%s198 + $0xe8] sm:$0xff] %vm1623, %v1516
        %1654 = vst.msk [vmem:[%s198 + $0xf0] sm:$0xff] %vm1623, %v1517
        %1655 = vst.msk [vmem:[%s198 + $0xf8] sm:$0xff] %vm1623, %v1518
        %1656 = vst.msk [vmem:[%s198 + $0x100] sm:$0xff] %vm1623, %v1519
        %1657 = vst.msk [vmem:[%s198 + $0x108] sm:$0xff] %vm1623, %v1520
        %1658 = vst.msk [vmem:[%s198 + $0x110] sm:$0xff] %vm1623, %v1521
        %1659 = vst.msk [vmem:[%s198 + $0x118] sm:$0xff] %vm1623, %v1522
        %1660 = vst.msk [vmem:[%s198 + $0x120] sm:$0xff] %vm1623, %v1523
        %1661 = vst.msk [vmem:[%s198 + $0x128] sm:$0xff] %vm1623, %v1524
        %1662 = vst.msk [vmem:[%s198 + $0x130] sm:$0xff] %vm1623, %v1525
        %1663 = vst.msk [vmem:[%s198 + $0x138] sm:$0xff] %vm1623, %v1526
        %1664 = vst.msk [vmem:[%s198 + $0x140] sm:$0xff] %vm1623, %v1527
        %1665 = vst.msk [vmem:[%s198 + $0x148] sm:$0xff] %vm1623, %v1528
        %1666 = vst.msk [vmem:[%s198 + $0x150] sm:$0xff] %vm1623, %v1529
        %1667 = vst.msk [vmem:[%s198 + $0x158] sm:$0xff] %vm1623, %v1530
        %1668 = vst.msk [vmem:[%s198 + $0x160] sm:$0xff] %vm1623, %v1531
        %1669 = vst.msk [vmem:[%s198 + $0x168] sm:$0xff] %vm1623, %v1532
        %1670 = vst.msk [vmem:[%s198 + $0x170] sm:$0xff] %vm1623, %v1533
        %1671 = vst.msk [vmem:[%s198 + $0x178] sm:$0xff] %vm1623, %v1534
        %1672 = vst.msk [vmem:[%s198 + $0x180] sm:$0xff] %vm1623, %v1535
        %1673 = vst.msk [vmem:[%s198 + $0x188] sm:$0xff] %vm1623, %v1536
        %1674 = vst.msk [vmem:[%s198 + $0x190] sm:$0xff] %vm1623, %v1537
        %1675 = vst.msk [vmem:[%s198 + $0x198] sm:$0xff] %vm1623, %v1538
        %1676 = vst.msk [vmem:[%s198 + $0x1a0] sm:$0xff] %vm1623, %v1539
        %1677 = vst.msk [vmem:[%s198 + $0x1a8] sm:$0xff] %vm1623, %v1540
        %1678 = vst.msk [vmem:[%s198 + $0x1b0] sm:$0xff] %vm1623, %v1541
        %1679 = vst.msk [vmem:[%s198 + $0x1b8] sm:$0xff] %vm1623, %v1542
        %1680 = vst.msk [vmem:[%s198 + $0x1c0] sm:$0xff] %vm1623, %v1543
        %1681 = vst.msk [vmem:[%s198 + $0x1c8] sm:$0xff] %vm1623, %v1544
        %1682 = vst.msk [vmem:[%s198 + $0x1d0] sm:$0xff] %vm1623, %v1545
        %1683 = vst.msk [vmem:[%s198 + $0x1d8] sm:$0xff] %vm1623, %v1546
        %1684 = vst.msk [vmem:[%s198 + $0x1e0] sm:$0xff] %vm1623, %v1547
        %1685 = vst.msk [vmem:[%s198 + $0x1e8] sm:$0xff] %vm1623, %v1548
        %1686 = vst.msk [vmem:[%s198 + $0x1f0] sm:$0xff] %vm1623, %v1549
        %1687 = vst.msk [vmem:[%s198 + $0x1f8] sm:$0xff] %vm1623, %v1550
        %1688 = vst.msk [vmem:[%s198 + $0x200] sm:$0xff] %vm1623, %v1551
        %1689 = vst.msk [vmem:[%s198 + $0x208] sm:$0xff] %vm1623, %v1552
        %1690 = vst.msk [vmem:[%s198 + $0x210] sm:$0xff] %vm1623, %v1553
        %1691 = vst.msk [vmem:[%s198 + $0x218] sm:$0xff] %vm1623, %v1554
        %1692 = vst.msk [vmem:[%s198 + $0x220] sm:$0xff] %vm1623, %v1555
        %1693 = vst.msk [vmem:[%s198 + $0x228] sm:$0xff] %vm1623, %v1556
        %1694 = vst.msk [vmem:[%s198 + $0x230] sm:$0xff] %vm1623, %v1557
        %1695 = vst.msk [vmem:[%s198 + $0x238] sm:$0xff] %vm1623, %v1558
        %1696 = vst.msk [vmem:[%s198 + $0x240] sm:$0xff] %vm1623, %v1559
        %1697 = vst.msk [vmem:[%s198 + $0x248] sm:$0xff] %vm1623, %v1560
        %1698 = vst.msk [vmem:[%s198 + $0x250] sm:$0xff] %vm1623, %v1561
        %1699 = vst.msk [vmem:[%s198 + $0x258] sm:$0xff] %vm1623, %v1562
        %1700 = vst.msk [vmem:[%s198 + $0x260] sm:$0xff] %vm1623, %v1563
        %1701 = vst.msk [vmem:[%s198 + $0x268] sm:$0xff] %vm1623, %v1564
        %1702 = vst.msk [vmem:[%s198 + $0x270] sm:$0xff] %vm1623, %v1565
        %1703 = vst.msk [vmem:[%s198 + $0x278] sm:$0xff] %vm1623, %v1566
        %1704 = vst.msk [vmem:[%s198 + $0x280] sm:$0xff] %vm1623, %v1567
        %1705 = vst.msk [vmem:[%s198 + $0x288] sm:$0xff] %vm1623, %v1568
        %1706 = vst.msk [vmem:[%s198 + $0x290] sm:$0xff] %vm1623, %v1569
        %1707 = vst.msk [vmem:[%s198 + $0x298] sm:$0xff] %vm1623, %v1570
        %1708 = vst.msk [vmem:[%s198 + $0x2a0] sm:$0xff] %vm1623, %v1571
        %1709 = vst.msk [vmem:[%s198 + $0x2a8] sm:$0xff] %vm1623, %v1572
        %1710 = vst.msk [vmem:[%s198 + $0x2b0] sm:$0xff] %vm1623, %v1573
        %1711 = vst.msk [vmem:[%s198 + $0x2b8] sm:$0xff] %vm1623, %v1574
        %1712 = vst.msk [vmem:[%s198 + $0x2c0] sm:$0xff] %vm1623, %v1575
        %1713 = vst.msk [vmem:[%s198 + $0x2c8] sm:$0xff] %vm1623, %v1576
        %1714 = vst.msk [vmem:[%s198 + $0x2d0] sm:$0xff] %vm1623, %v1577
        %1715 = vst.msk [vmem:[%s198 + $0x2d8] sm:$0xff] %vm1623, %v1578
        %1716 = vst.msk [vmem:[%s198 + $0x2e0] sm:$0xff] %vm1623, %v1579
        %1717 = vst.msk [vmem:[%s198 + $0x2e8] sm:$0xff] %vm1623, %v1580
        %1718 = vst.msk [vmem:[%s198 + $0x2f0] sm:$0xff] %vm1623, %v1581
        %1719 = vst.msk [vmem:[%s198 + $0x2f8] sm:$0xff] %vm1623, %v1582
        %1720 = vst.msk [vmem:[%s198 + $0x300] sm:$0xff] %vm1623, %v1583
        %1721 = vst.msk [vmem:[%s198 + $0x308] sm:$0xff] %vm1623, %v1584
        %1722 = vst.msk [vmem:[%s198 + $0x310] sm:$0xff] %vm1623, %v1585
        %1723 = vst.msk [vmem:[%s198 + $0x318] sm:$0xff] %vm1623, %v1586
        %1724 = vst.msk [vmem:[%s198 + $0x320] sm:$0xff] %vm1623, %v1587
        %1725 = vst.msk [vmem:[%s198 + $0x328] sm:$0xff] %vm1623, %v1588
        %1726 = vst.msk [vmem:[%s198 + $0x330] sm:$0xff] %vm1623, %v1589
        %1727 = vst.msk [vmem:[%s198 + $0x338] sm:$0xff] %vm1623, %v1590
        %1728 = vst.msk [vmem:[%s198 + $0x340] sm:$0xff] %vm1623, %v1591
        %1729 = vst.msk [vmem:[%s198 + $0x348] sm:$0xff] %vm1623, %v1592
        %1730 = vst.msk [vmem:[%s198 + $0x350] sm:$0xff] %vm1623, %v1593
        %1731 = vst.msk [vmem:[%s198 + $0x358] sm:$0xff] %vm1623, %v1594
        %1732 = vst.msk [vmem:[%s198 + $0x360] sm:$0xff] %vm1623, %v1595
        %1733 = vst.msk [vmem:[%s198 + $0x368] sm:$0xff] %vm1623, %v1596
        %1734 = vst.msk [vmem:[%s198 + $0x370] sm:$0xff] %vm1623, %v1597
        %1735 = vst.msk [vmem:[%s198 + $0x378] sm:$0xff] %vm1623, %v1598
        %1736 = vst.msk [vmem:[%s198 + $0x380] sm:$0xff] %vm1623, %v1599
        %1737 = vst.msk [vmem:[%s198 + $0x388] sm:$0xff] %vm1623, %v1600
        %1738 = vst.msk [vmem:[%s198 + $0x390] sm:$0xff] %vm1623, %v1601
        %1739 = vst.msk [vmem:[%s198 + $0x398] sm:$0xff] %vm1623, %v1602
        %1740 = vst.msk [vmem:[%s198 + $0x3a0] sm:$0xff] %vm1623, %v1603
        %1741 = vst.msk [vmem:[%s198 + $0x3a8] sm:$0xff] %vm1623, %v1604
        %1742 = vst.msk [vmem:[%s198 + $0x3b0] sm:$0xff] %vm1623, %v1605
        %1743 = vst.msk [vmem:[%s198 + $0x3b8] sm:$0xff] %vm1623, %v1606
        %1744 = vst.msk [vmem:[%s198 + $0x3c0] sm:$0xff] %vm1623, %v1607
        %1745 = vst.msk [vmem:[%s198 + $0x3c8] sm:$0xff] %vm1623, %v1608
        %1746 = vst.msk [vmem:[%s198 + $0x3d0] sm:$0xff] %vm1623, %v1609
        %1747 = vst.msk [vmem:[%s198 + $0x3d8] sm:$0xff] %vm1623, %v1610
        %1748 = vst.msk [vmem:[%s198 + $0x3e0] sm:$0xff] %vm1623, %v1611
        %1749 = vst.msk [vmem:[%s198 + $0x3e8] sm:$0xff] %vm1623, %v1612
        %1750 = vst.msk [vmem:[%s198 + $0x3f0] sm:$0xff] %vm1623, %v1613
        %1751 = vst.msk [vmem:[%s198 + $0x3f8] sm:$0xff] %vm1623, %v1614
        %1752 = vst.msk [vmem:[%s198 + $0x400] sm:$0xff] %vm1623, %v1615
        %1753 = vst.msk [vmem:[%s198 + $0x408] sm:$0xff] %vm1623, %v1616
        %1754 = vst.msk [vmem:[%s198 + $0x410] sm:$0xff] %vm1623, %v1617
        %1755 = vst.msk [vmem:[%s198 + $0x418] sm:$0xff] %vm1623, %v1618
        %1756 = vst.msk [vmem:[%s198 + $0x420] sm:$0xff] %vm1623, %v1619
        %1757 = vst.msk [vmem:[%s198 + $0x428] sm:$0xff] %vm1623, %v1620
        %1758 = vst.msk [vmem:[%s198 + $0x430] sm:$0xff] %vm1623, %v1621
        %1759 = vst.msk [vmem:[%s198 + $0x438] sm:$0xff] %vm1623, %v1622
        %p1760 = scmp.lt.s32.totalorder %s16, 1
        %s1761 = scalar_select %p1760, %s16, 1
        %s1762 = smul.addr %s1761, 136
        %s1763 = smul.addr %s1762, 8
        %s1764 = scalar_lea.vmem %s3, %s1763
        // Predicated region
        $region41: #{tpu_custom_call.1} parent=31 // pred_check
          %p1765 = pneg %p102
        $region42: #{tpu_custom_call.1} parent=31 // pred_check_branch
          %1767 = sbr.rel (%p1765) target = $region44
        $region43: #{tpu_custom_call.1} parent=31 // pred_region
          _
        $region44: #{tpu_custom_call.1} parent=31 // pred_fallthru
          _
      $region32: #{tpu_custom_call.1} parent=5 // pred_fallthru
        _
      %p1768 = scmp.le.s32.totalorder 2, %s11
      // Predicated region
      $region45: #{tpu_custom_call.1} parent=5 // pred_check
        %p1769 = pneg %p1768
      $region46: #{tpu_custom_call.1} parent=5 // pred_check_branch
        %1771 = sbr.rel (%p1769) target = $region48
      $region47: #{tpu_custom_call.1} parent=5 // pred_region
        %s1772 = ssub.s32 %s11, 2
        // Predicated region
        $region49: #{tpu_custom_call.1} parent=47 // pred_check
          %p1773 = pneg %p108
        $region50: #{tpu_custom_call.1} parent=47 // pred_check_branch
          %1775 = sbr.rel (%p1773) target = $region52
        $region51: #{tpu_custom_call.1} parent=47 // pred_region
          %p1776 = scmp.lt.s32.totalorder %s17, 1
          %s1777 = scalar_select %p1776, %s17, 1
          %s1778 = smul.addr %s1777, 136
          %s1779 = smul.addr %s1778, 8
          %s1780 = scalar_lea.vmem %s3, %s1779
        $region52: #{tpu_custom_call.1} parent=47 // pred_fallthru
          _
      $region48: #{tpu_custom_call.1} parent=5 // pred_fallthru
        _
    $region6: #{tpu_custom_call.1} parent=1 // loop_footer
      %s15 = sadd.s32 1, %s11
    $region7: #{tpu_custom_call.1} parent=1 // loop_footer_branch
      %10 = sbr.rel target = $region3
    $region8: #{tpu_custom_call.1} parent=1 // loop_exit
      _
    %1781 = vsyncpa [#allocation3], 1
    %s1782 = scalar_lea.sflag [#allocation3], 1
    %1783 = vsyncpa %s1782, 1
    %1784 = vsyncpa [#allocation5], 1

</llo_original>
